<compile_context>
chip_gen: v7x
topology: tpu7x:2x2x1
jax: 0.10.0
libtpu: 0.0.40
codegen_flags: <defaults>
</compile_context>

<pallas_src>
import math

import jax
import jax.numpy as jnp
from jax.experimental import pallas as pl
from jax.experimental.pallas import tpu as pltpu

# ---- model hyperparameters (h must be 3 per the module's hard-coded mask) ----
B = 2          # batch
S = 8          # sequence length
D = 48         # d_model (divisible by h=3)
H = 3          # number of heads (forced by mask shape in attention())
DK = D // H    # per-head dim
DFF = 96       # feed-forward hidden dim
EPS = 1e-6
# Dropout: eval mode -> identity (no RNG in forward).


def _layer_norm(x, alpha, bias):
    # torch: mean over last dim; std is UNBIASED (divisor D-1); divide by (std+eps)
    mean = jnp.mean(x, axis=-1, keepdims=True)
    diff = x - mean
    var = jnp.sum(diff * diff, axis=-1, keepdims=True) * (1.0 / (D - 1))
    std = jnp.sqrt(var)
    inv = pl.reciprocal(std + EPS, approx=True)     # EUP slot, off the VALU path
    return alpha * (diff * inv) + bias


def encoder_block_kernel(
    x_ref,                                # (B*S, D) f32
    wq_ref, wk_ref, wv_ref,               # (H, D, DK) bf16 each
    wo_ref,                               # (H, DK, D) bf16
    ln1_a_ref, ln1_b_ref,                 # (1, D) f32
    w1_ref, b1_ref,                       # (D, DFF) bf16, (1, DFF) f32
    w2_ref, b2_ref,                       # (DFF, D) bf16, (1, D) f32
    ln2_a_ref, ln2_b_ref,                 # (1, D) f32
    o_ref,                                # (B*S, D) f32
):
    x = x_ref[...]                        # (16, 48) f32, all batches merged

    # ---- residual connection 0: self-attention on LayerNorm1(x) ----
    xn = _layer_norm(x, ln1_a_ref[...], ln1_b_ref[...])
    xn_bf = xn.astype(jnp.bfloat16)       # single cast feeds all QKV dots

    inv_sqrt_dk = 1.0 / math.sqrt(DK)
    attn_out = jnp.zeros((B * S, D), jnp.float32)

    for hh in range(H):                   # static loop over heads (H = 3)
        # Head-major weights: no lane slicing of a fused QKV result.
        qh = jnp.dot(xn_bf, wq_ref[hh], preferred_element_type=jnp.float32)  # (16, DK)
        kh = jnp.dot(xn_bf, wk_ref[hh], preferred_element_type=jnp.float32)
        vh = jnp.dot(xn_bf, wv_ref[hh], preferred_element_type=jnp.float32)

        per_batch = []
        for bb in range(B):               # static loop; sublane slices at 0 / 8 (free)
            lo = bb * S
            qb = qh[lo:lo + S, :]         # (S, DK)
            kb = kh[lo:lo + S, :]
            vb = vh[lo:lo + S, :]
            # scores = q @ k^T / sqrt(dk)   (tiny dots: keep f32, no extra casts)
            scores = jax.lax.dot_general(
                qb, kb, (((1,), (1,)), ((), ())),
                preferred_element_type=jnp.float32) * inv_sqrt_dk            # (S, S)
            # masked_fill with an all-ones mask is a no-op -> plain softmax
            scores = scores - jnp.max(scores, axis=-1, keepdims=True)
            p = jnp.exp(scores)
            p = p * pl.reciprocal(jnp.sum(p, axis=-1, keepdims=True), approx=True)
            per_batch.append(jnp.dot(p, vb, preferred_element_type=jnp.float32))  # (S, DK)

        # Sublane concat at an 8-row boundary (vreg-aligned, cheap).
        oh = jnp.concatenate(per_batch, axis=0)                              # (16, DK)
        # Distributed W_O: sum over heads replaces the lane concat + fused dot.
        attn_out = attn_out + jnp.dot(oh.astype(jnp.bfloat16), wo_ref[hh],
                                      preferred_element_type=jnp.float32)    # (16, D)

    x1 = x + attn_out                     # dropout is identity (eval mode)

    # ---- residual connection 1: feed-forward on LayerNorm2(x1) ----
    xn2 = _layer_norm(x1, ln2_a_ref[...], ln2_b_ref[...])
    h1 = jnp.dot(xn2.astype(jnp.bfloat16), w1_ref[...],
                 preferred_element_type=jnp.float32) + b1_ref[...]           # (16, DFF)
    h1 = jnp.maximum(h1, 0.0)
    ff = jnp.dot(h1.astype(jnp.bfloat16), w2_ref[...],
                 preferred_element_type=jnp.float32) + b2_ref[...]           # (16, D)

    # D = 48 < 128 lanes -> masked store; fine at this size (keep D on the lane
    # axis and widen toward a 128-multiple only when the model scales).
    o_ref[...] = x1 + ff


def encoder_block(x, params):
    (wq, wk, wv, wo, ln1_a, ln1_b, w1, b1, w2, b2, ln2_a, ln2_b) = params

    # Repack for the kernel (done once in the wrapper, outside the kernel):
    #   q[:, h*DK:(h+1)*DK] = x @ wq[:, h*DK:(h+1)*DK]  ->  head-major (H, D, DK)
    #   attn @ wo = sum_h attn[:, h*DK:(h+1)*DK] @ wo[h*DK:(h+1)*DK, :]  ->  (H, DK, D)
    wq_h = wq.reshape(D, H, DK).transpose(1, 0, 2).astype(jnp.bfloat16)
    wk_h = wk.reshape(D, H, DK).transpose(1, 0, 2).astype(jnp.bfloat16)
    wv_h = wv.reshape(D, H, DK).transpose(1, 0, 2).astype(jnp.bfloat16)
    wo_h = wo.reshape(H, DK, D).astype(jnp.bfloat16)

    inputs = (
        x.reshape(B * S, D),              # merged (B*S, D) view
        wq_h, wk_h, wv_h, wo_h,
        ln1_a, ln1_b,
        w1.astype(jnp.bfloat16), b1,
        w2.astype(jnp.bfloat16), b2,
        ln2_a, ln2_b,
    )

    vmem = pl.BlockSpec(memory_space=pltpu.MemorySpace.VMEM)
    out = pl.pallas_call(
        encoder_block_kernel,
        out_shape=jax.ShapeDtypeStruct((B * S, D), jnp.float32),
        in_specs=[vmem] * len(inputs),    # single program, whole arrays in VMEM
        out_specs=vmem,
    )(*inputs)
    return out.reshape(B, S, D)


# ---- pure-JAX f32 reference (same math as the PyTorch module) ----
def encoder_block_ref(x, params):
    (wq, wk, wv, wo, ln1_a, ln1_b, w1, b1, w2, b2, ln2_a, ln2_b) = params

    def ln(z, a, bb):
        mean = jnp.mean(z, axis=-1, keepdims=True)
        diff = z - mean
        var = jnp.sum(diff * diff, axis=-1, keepdims=True) / (D - 1)
        return a * diff / (jnp.sqrt(var) + EPS) + bb

    xn = ln(x, ln1_a, ln1_b)
    q = xn @ wq
    k = xn @ wk
    v = xn @ wv
    qh = q.reshape(B, S, H, DK).transpose(0, 2, 1, 3)
    kh = k.reshape(B, S, H, DK).transpose(0, 2, 1, 3)
    vh = v.reshape(B, S, H, DK).transpose(0, 2, 1, 3)
    scores = jnp.einsum("bhqd,bhkd->bhqk", qh, kh) / math.sqrt(DK)
    p = jax.nn.softmax(scores, axis=-1)
    o = jnp.einsum("bhqk,bhkd->bhqd", p, vh)
    o = o.transpose(0, 2, 1, 3).reshape(B, S, D) @ wo
    x1 = x + o
    xn2 = ln(x1, ln2_a, ln2_b)
    ff = jnp.maximum(xn2 @ w1 + b1, 0.0) @ w2 + b2
    return x1 + ff


def init_params(key):
    ks = jax.random.split(key, 8)
    scale = 0.05
    wq = scale * jax.random.normal(ks[0], (D, D), jnp.float32)
    wk = scale * jax.random.normal(ks[1], (D, D), jnp.float32)
    wv = scale * jax.random.normal(ks[2], (D, D), jnp.float32)
    wo = scale * jax.random.normal(ks[3], (D, D), jnp.float32)
    ln1_a = jnp.ones((1, D), jnp.float32)
    ln1_b = jnp.zeros((1, D), jnp.float32)
    w1 = scale * jax.random.normal(ks[4], (D, DFF), jnp.float32)
    b1 = 0.01 * jax.random.normal(ks[5], (1, DFF), jnp.float32)
    w2 = scale * jax.random.normal(ks[6], (DFF, D), jnp.float32)
    b2 = 0.01 * jax.random.normal(ks[7], (1, D), jnp.float32)
    ln2_a = jnp.ones((1, D), jnp.float32)
    ln2_b = jnp.zeros((1, D), jnp.float32)
    return (wq, wk, wv, wo, ln1_a, ln1_b, w1, b1, w2, b2, ln2_a, ln2_b)


if __name__ == "__main__":
    key = jax.random.PRNGKey(0)
    kx, kp = jax.random.split(key)
    x = jax.random.normal(kx, (B, S, D), jnp.float32)
    params = init_params(kp)
    # src_mask is ignored by the module's attention (it rebuilds an all-ones
    # mask), so it is not an input to the kernel.

    out = encoder_block(x, params)
    out = jax.block_until_ready(out)

    ref = encoder_block_ref(x, params)
    assert out.shape == (B, S, D)
    # bf16 MXU operands + approx (EUP) reciprocals -> looser tolerance than the
    # pure-f32 version (as flagged in the review); observed error is ~1e-3.
    assert jnp.allclose(out, ref, atol=2e-2, rtol=2e-2), "mismatch vs pure-JAX reference"

    print("KERNEL_OK")
</pallas_src>

<mosaic_0001>
module attributes {stable_mosaic.version = 11 : i64} {
  func.func @encoder_block_kernel(%arg0: memref<16x48xf32, #tpu.memory_space<vmem>>, %arg1: memref<3x48x16xbf16, #tpu.memory_space<vmem>>, %arg2: memref<3x48x16xbf16, #tpu.memory_space<vmem>>, %arg3: memref<3x48x16xbf16, #tpu.memory_space<vmem>>, %arg4: memref<3x16x48xbf16, #tpu.memory_space<vmem>>, %arg5: memref<1x48xf32, #tpu.memory_space<vmem>>, %arg6: memref<1x48xf32, #tpu.memory_space<vmem>>, %arg7: memref<48x96xbf16, #tpu.memory_space<vmem>>, %arg8: memref<1x96xf32, #tpu.memory_space<vmem>>, %arg9: memref<96x48xbf16, #tpu.memory_space<vmem>>, %arg10: memref<1x48xf32, #tpu.memory_space<vmem>>, %arg11: memref<1x48xf32, #tpu.memory_space<vmem>>, %arg12: memref<1x48xf32, #tpu.memory_space<vmem>>, %arg13: memref<16x48xf32, #tpu.memory_space<vmem>>) attributes {dimension_semantics = [], scalar_prefetch = 0 : i64, scratch_operands = 0 : i64, tpu.core_type = #tpu.core_type<tc>} {
    %c0 = arith.constant 0 : index
    %c0_0 = arith.constant 0 : index
    %0 = vector.load %arg0[%c0, %c0_0] : memref<16x48xf32, #tpu.memory_space<vmem>>, vector<16x48xf32>
    %c0_1 = arith.constant 0 : index
    %c0_2 = arith.constant 0 : index
    %1 = vector.load %arg5[%c0_1, %c0_2] : memref<1x48xf32, #tpu.memory_space<vmem>>, vector<1x48xf32>
    %c0_3 = arith.constant 0 : index
    %c0_4 = arith.constant 0 : index
    %2 = vector.load %arg6[%c0_3, %c0_4] : memref<1x48xf32, #tpu.memory_space<vmem>>, vector<1x48xf32>
    %cst = arith.constant dense<0.000000e+00> : vector<16xf32>
    %3 = vector.multi_reduction <add>, %0, %cst [1] : vector<16x48xf32> to vector<16xf32>
    %4 = vector.shape_cast %3 : vector<16xf32> to vector<16x1xf32>
    %cst_5 = arith.constant 4.800000e+01 : f32
    %5 = vector.broadcast %cst_5 : f32 to vector<16x1xf32>
    %6 = arith.divf %4, %5 : vector<16x1xf32>
    %7 = vector.broadcast %6 : vector<16x1xf32> to vector<16x48xf32>
    %8 = arith.subf %0, %7 : vector<16x48xf32>
    %9 = arith.mulf %8, %8 : vector<16x48xf32>
    %cst_6 = arith.constant dense<0.000000e+00> : vector<16xf32>
    %10 = vector.multi_reduction <add>, %9, %cst_6 [1] : vector<16x48xf32> to vector<16xf32>
    %11 = vector.shape_cast %10 : vector<16xf32> to vector<16x1xf32>
    %cst_7 = arith.constant 0.0212765951 : f32
    %12 = vector.broadcast %cst_7 : f32 to vector<16x1xf32>
    %13 = arith.mulf %11, %12 : vector<16x1xf32>
    %14 = math.sqrt %13 : vector<16x1xf32>
    %cst_8 = arith.constant 9.99999997E-7 : f32
    %15 = vector.broadcast %cst_8 : f32 to vector<16x1xf32>
    %16 = arith.addf %14, %15 : vector<16x1xf32>
    %17 = tpu.reciprocal %16 {approx = true} : vector<16x1xf32> -> vector<16x1xf32>
    %18 = vector.broadcast %17 : vector<16x1xf32> to vector<16x48xf32>
    %19 = arith.mulf %8, %18 : vector<16x48xf32>
    %20 = vector.broadcast %1 : vector<1x48xf32> to vector<16x48xf32>
    %21 = arith.mulf %20, %19 : vector<16x48xf32>
    %22 = vector.broadcast %2 : vector<1x48xf32> to vector<16x48xf32>
    %23 = arith.addf %21, %22 : vector<16x48xf32>
    %24 = arith.truncf %23 : vector<16x48xf32> to vector<16x48xbf16>
    %cst_9 = arith.constant 0.000000e+00 : f32
    %25 = vector.broadcast %cst_9 : f32 to vector<16x48xf32>
    %c0_10 = arith.constant 0 : index
    %c0_11 = arith.constant 0 : index
    %c0_12 = arith.constant 0 : index
    %26 = vector.load %arg1[%c0_10, %c0_11, %c0_12] : memref<3x48x16xbf16, #tpu.memory_space<vmem>>, vector<1x48x16xbf16>
    %27 = vector.shape_cast %26 : vector<1x48x16xbf16> to vector<48x16xbf16>
    %cst_13 = arith.constant dense<0.000000e+00> : vector<16x16xf32>
    %28 = tpu.matmul %24, %27, %cst_13 {dimension_numbers = #tpu.dot_dimension_numbers<[1], [0], [0], [1], [0, 0, 1, 1], [], []>} : vector<16x48xbf16>, vector<48x16xbf16>, vector<16x16xf32> -> vector<16x16xf32>
    %c0_14 = arith.constant 0 : index
    %c0_15 = arith.constant 0 : index
    %c0_16 = arith.constant 0 : index
    %29 = vector.load %arg2[%c0_14, %c0_15, %c0_16] : memref<3x48x16xbf16, #tpu.memory_space<vmem>>, vector<1x48x16xbf16>
    %30 = vector.shape_cast %29 : vector<1x48x16xbf16> to vector<48x16xbf16>
    %cst_17 = arith.constant dense<0.000000e+00> : vector<16x16xf32>
    %31 = tpu.matmul %24, %30, %cst_17 {dimension_numbers = #tpu.dot_dimension_numbers<[1], [0], [0], [1], [0, 0, 1, 1], [], []>} : vector<16x48xbf16>, vector<48x16xbf16>, vector<16x16xf32> -> vector<16x16xf32>
    %c0_18 = arith.constant 0 : index
    %c0_19 = arith.constant 0 : index
    %c0_20 = arith.constant 0 : index
    %32 = vector.load %arg3[%c0_18, %c0_19, %c0_20] : memref<3x48x16xbf16, #tpu.memory_space<vmem>>, vector<1x48x16xbf16>
    %33 = vector.shape_cast %32 : vector<1x48x16xbf16> to vector<48x16xbf16>
    %cst_21 = arith.constant dense<0.000000e+00> : vector<16x16xf32>
    %34 = tpu.matmul %24, %33, %cst_21 {dimension_numbers = #tpu.dot_dimension_numbers<[1], [0], [0], [1], [0, 0, 1, 1], [], []>} : vector<16x48xbf16>, vector<48x16xbf16>, vector<16x16xf32> -> vector<16x16xf32>
    %35 = vector.extract_strided_slice %28 {offsets = [0, 0], sizes = [8, 16], strides = [1, 1]} : vector<16x16xf32> to vector<8x16xf32>
    %36 = vector.extract_strided_slice %31 {offsets = [0, 0], sizes = [8, 16], strides = [1, 1]} : vector<16x16xf32> to vector<8x16xf32>
    %37 = vector.extract_strided_slice %34 {offsets = [0, 0], sizes = [8, 16], strides = [1, 1]} : vector<16x16xf32> to vector<8x16xf32>
    %cst_22 = arith.constant dense<0.000000e+00> : vector<8x8xf32>
    %38 = tpu.matmul %35, %36, %cst_22 {dimension_numbers = #tpu.dot_dimension_numbers<[1], [1], [0], [0], [0, 0, 1, 0], [], []>} : vector<8x16xf32>, vector<8x16xf32>, vector<8x8xf32> -> vector<8x8xf32>
    %cst_23 = arith.constant 2.500000e-01 : f32
    %39 = vector.broadcast %cst_23 : f32 to vector<8x8xf32>
    %40 = arith.mulf %38, %39 : vector<8x8xf32>
    %cst_24 = arith.constant dense<0xFF800000> : vector<8xf32>
    %41 = vector.multi_reduction <maximumf>, %40, %cst_24 [1] : vector<8x8xf32> to vector<8xf32>
    %42 = vector.shape_cast %41 : vector<8xf32> to vector<8x1xf32>
    %43 = vector.broadcast %42 : vector<8x1xf32> to vector<8x8xf32>
    %44 = arith.subf %40, %43 : vector<8x8xf32>
    %45 = math.exp %44 : vector<8x8xf32>
    %cst_25 = arith.constant dense<0.000000e+00> : vector<8xf32>
    %46 = vector.multi_reduction <add>, %45, %cst_25 [1] : vector<8x8xf32> to vector<8xf32>
    %47 = vector.shape_cast %46 : vector<8xf32> to vector<8x1xf32>
    %48 = tpu.reciprocal %47 {approx = true} : vector<8x1xf32> -> vector<8x1xf32>
    %49 = vector.broadcast %48 : vector<8x1xf32> to vector<8x8xf32>
    %50 = arith.mulf %45, %49 : vector<8x8xf32>
    %cst_26 = arith.constant dense<0.000000e+00> : vector<8x16xf32>
    %51 = tpu.matmul %50, %37, %cst_26 {dimension_numbers = #tpu.dot_dimension_numbers<[1], [0], [0], [1], [0, 0, 1, 1], [], []>} : vector<8x8xf32>, vector<8x16xf32>, vector<8x16xf32> -> vector<8x16xf32>
    %52 = vector.extract_strided_slice %28 {offsets = [8, 0], sizes = [8, 16], strides = [1, 1]} : vector<16x16xf32> to vector<8x16xf32>
    %53 = vector.extract_strided_slice %31 {offsets = [8, 0], sizes = [8, 16], strides = [1, 1]} : vector<16x16xf32> to vector<8x16xf32>
    %54 = vector.extract_strided_slice %34 {offsets = [8, 0], sizes = [8, 16], strides = [1, 1]} : vector<16x16xf32> to vector<8x16xf32>
    %cst_27 = arith.constant dense<0.000000e+00> : vector<8x8xf32>
    %55 = tpu.matmul %52, %53, %cst_27 {dimension_numbers = #tpu.dot_dimension_numbers<[1], [1], [0], [0], [0, 0, 1, 0], [], []>} : vector<8x16xf32>, vector<8x16xf32>, vector<8x8xf32> -> vector<8x8xf32>
    %cst_28 = arith.constant 2.500000e-01 : f32
    %56 = vector.broadcast %cst_28 : f32 to vector<8x8xf32>
    %57 = arith.mulf %55, %56 : vector<8x8xf32>
    %cst_29 = arith.constant dense<0xFF800000> : vector<8xf32>
    %58 = vector.multi_reduction <maximumf>, %57, %cst_29 [1] : vector<8x8xf32> to vector<8xf32>
    %59 = vector.shape_cast %58 : vector<8xf32> to vector<8x1xf32>
    %60 = vector.broadcast %59 : vector<8x1xf32> to vector<8x8xf32>
    %61 = arith.subf %57, %60 : vector<8x8xf32>
    %62 = math.exp %61 : vector<8x8xf32>
    %cst_30 = arith.constant dense<0.000000e+00> : vector<8xf32>
    %63 = vector.multi_reduction <add>, %62, %cst_30 [1] : vector<8x8xf32> to vector<8xf32>
    %64 = vector.shape_cast %63 : vector<8xf32> to vector<8x1xf32>
    %65 = tpu.reciprocal %64 {approx = true} : vector<8x1xf32> -> vector<8x1xf32>
    %66 = vector.broadcast %65 : vector<8x1xf32> to vector<8x8xf32>
    %67 = arith.mulf %62, %66 : vector<8x8xf32>
    %cst_31 = arith.constant dense<0.000000e+00> : vector<8x16xf32>
    %68 = tpu.matmul %67, %54, %cst_31 {dimension_numbers = #tpu.dot_dimension_numbers<[1], [0], [0], [1], [0, 0, 1, 1], [], []>} : vector<8x8xf32>, vector<8x16xf32>, vector<8x16xf32> -> vector<8x16xf32>
    %69 = tpu.concatenate %51, %68 in 0 : vector<8x16xf32>, vector<8x16xf32> -> vector<16x16xf32>
    %70 = arith.truncf %69 : vector<16x16xf32> to vector<16x16xbf16>
    %c0_32 = arith.constant 0 : index
    %c0_33 = arith.constant 0 : index
    %c0_34 = arith.constant 0 : index
    %71 = vector.load %arg4[%c0_32, %c0_33, %c0_34] : memref<3x16x48xbf16, #tpu.memory_space<vmem>>, vector<1x16x48xbf16>
    %72 = vector.shape_cast %71 : vector<1x16x48xbf16> to vector<16x48xbf16>
    %cst_35 = arith.constant dense<0.000000e+00> : vector<16x48xf32>
    %73 = tpu.matmul %70, %72, %cst_35 {dimension_numbers = #tpu.dot_dimension_numbers<[1], [0], [0], [1], [0, 0, 1, 1], [], []>} : vector<16x16xbf16>, vector<16x48xbf16>, vector<16x48xf32> -> vector<16x48xf32>
    %74 = arith.addf %25, %73 : vector<16x48xf32>
    %c1 = arith.constant 1 : index
    %c0_36 = arith.constant 0 : index
    %c0_37 = arith.constant 0 : index
    %75 = vector.load %arg1[%c1, %c0_36, %c0_37] : memref<3x48x16xbf16, #tpu.memory_space<vmem>>, vector<1x48x16xbf16>
    %76 = vector.shape_cast %75 : vector<1x48x16xbf16> to vector<48x16xbf16>
    %cst_38 = arith.constant dense<0.000000e+00> : vector<16x16xf32>
    %77 = tpu.matmul %24, %76, %cst_38 {dimension_numbers = #tpu.dot_dimension_numbers<[1], [0], [0], [1], [0, 0, 1, 1], [], []>} : vector<16x48xbf16>, vector<48x16xbf16>, vector<16x16xf32> -> vector<16x16xf32>
    %c1_39 = arith.constant 1 : index
    %c0_40 = arith.constant 0 : index
    %c0_41 = arith.constant 0 : index
    %78 = vector.load %arg2[%c1_39, %c0_40, %c0_41] : memref<3x48x16xbf16, #tpu.memory_space<vmem>>, vector<1x48x16xbf16>
    %79 = vector.shape_cast %78 : vector<1x48x16xbf16> to vector<48x16xbf16>
    %cst_42 = arith.constant dense<0.000000e+00> : vector<16x16xf32>
    %80 = tpu.matmul %24, %79, %cst_42 {dimension_numbers = #tpu.dot_dimension_numbers<[1], [0], [0], [1], [0, 0, 1, 1], [], []>} : vector<16x48xbf16>, vector<48x16xbf16>, vector<16x16xf32> -> vector<16x16xf32>
    %c1_43 = arith.constant 1 : index
    %c0_44 = arith.constant 0 : index
    %c0_45 = arith.constant 0 : index
    %81 = vector.load %arg3[%c1_43, %c0_44, %c0_45] : memref<3x48x16xbf16, #tpu.memory_space<vmem>>, vector<1x48x16xbf16>
    %82 = vector.shape_cast %81 : vector<1x48x16xbf16> to vector<48x16xbf16>
    %cst_46 = arith.constant dense<0.000000e+00> : vector<16x16xf32>
    %83 = tpu.matmul %24, %82, %cst_46 {dimension_numbers = #tpu.dot_dimension_numbers<[1], [0], [0], [1], [0, 0, 1, 1], [], []>} : vector<16x48xbf16>, vector<48x16xbf16>, vector<16x16xf32> -> vector<16x16xf32>
    %84 = vector.extract_strided_slice %77 {offsets = [0, 0], sizes = [8, 16], strides = [1, 1]} : vector<16x16xf32> to vector<8x16xf32>
    %85 = vector.extract_strided_slice %80 {offsets = [0, 0], sizes = [8, 16], strides = [1, 1]} : vector<16x16xf32> to vector<8x16xf32>
    %86 = vector.extract_strided_slice %83 {offsets = [0, 0], sizes = [8, 16], strides = [1, 1]} : vector<16x16xf32> to vector<8x16xf32>
    %cst_47 = arith.constant dense<0.000000e+00> : vector<8x8xf32>
    %87 = tpu.matmul %84, %85, %cst_47 {dimension_numbers = #tpu.dot_dimension_numbers<[1], [1], [0], [0], [0, 0, 1, 0], [], []>} : vector<8x16xf32>, vector<8x16xf32>, vector<8x8xf32> -> vector<8x8xf32>
    %cst_48 = arith.constant 2.500000e-01 : f32
    %88 = vector.broadcast %cst_48 : f32 to vector<8x8xf32>
    %89 = arith.mulf %87, %88 : vector<8x8xf32>
    %cst_49 = arith.constant dense<0xFF800000> : vector<8xf32>
    %90 = vector.multi_reduction <maximumf>, %89, %cst_49 [1] : vector<8x8xf32> to vector<8xf32>
    %91 = vector.shape_cast %90 : vector<8xf32> to vector<8x1xf32>
    %92 = vector.broadcast %91 : vector<8x1xf32> to vector<8x8xf32>
    %93 = arith.subf %89, %92 : vector<8x8xf32>
    %94 = math.exp %93 : vector<8x8xf32>
    %cst_50 = arith.constant dense<0.000000e+00> : vector<8xf32>
    %95 = vector.multi_reduction <add>, %94, %cst_50 [1] : vector<8x8xf32> to vector<8xf32>
    %96 = vector.shape_cast %95 : vector<8xf32> to vector<8x1xf32>
    %97 = tpu.reciprocal %96 {approx = true} : vector<8x1xf32> -> vector<8x1xf32>
    %98 = vector.broadcast %97 : vector<8x1xf32> to vector<8x8xf32>
    %99 = arith.mulf %94, %98 : vector<8x8xf32>
    %cst_51 = arith.constant dense<0.000000e+00> : vector<8x16xf32>
    %100 = tpu.matmul %99, %86, %cst_51 {dimension_numbers = #tpu.dot_dimension_numbers<[1], [0], [0], [1], [0, 0, 1, 1], [], []>} : vector<8x8xf32>, vector<8x16xf32>, vector<8x16xf32> -> vector<8x16xf32>
    %101 = vector.extract_strided_slice %77 {offsets = [8, 0], sizes = [8, 16], strides = [1, 1]} : vector<16x16xf32> to vector<8x16xf32>
    %102 = vector.extract_strided_slice %80 {offsets = [8, 0], sizes = [8, 16], strides = [1, 1]} : vector<16x16xf32> to vector<8x16xf32>
    %103 = vector.extract_strided_slice %83 {offsets = [8, 0], sizes = [8, 16], strides = [1, 1]} : vector<16x16xf32> to vector<8x16xf32>
    %cst_52 = arith.constant dense<0.000000e+00> : vector<8x8xf32>
    %104 = tpu.matmul %101, %102, %cst_52 {dimension_numbers = #tpu.dot_dimension_numbers<[1], [1], [0], [0], [0, 0, 1, 0], [], []>} : vector<8x16xf32>, vector<8x16xf32>, vector<8x8xf32> -> vector<8x8xf32>
    %cst_53 = arith.constant 2.500000e-01 : f32
    %105 = vector.broadcast %cst_53 : f32 to vector<8x8xf32>
    %106 = arith.mulf %104, %105 : vector<8x8xf32>
    %cst_54 = arith.constant dense<0xFF800000> : vector<8xf32>
    %107 = vector.multi_reduction <maximumf>, %106, %cst_54 [1] : vector<8x8xf32> to vector<8xf32>
    %108 = vector.shape_cast %107 : vector<8xf32> to vector<8x1xf32>
    %109 = vector.broadcast %108 : vector<8x1xf32> to vector<8x8xf32>
    %110 = arith.subf %106, %109 : vector<8x8xf32>
    %111 = math.exp %110 : vector<8x8xf32>
    %cst_55 = arith.constant dense<0.000000e+00> : vector<8xf32>
    %112 = vector.multi_reduction <add>, %111, %cst_55 [1] : vector<8x8xf32> to vector<8xf32>
    %113 = vector.shape_cast %112 : vector<8xf32> to vector<8x1xf32>
    %114 = tpu.reciprocal %113 {approx = true} : vector<8x1xf32> -> vector<8x1xf32>
    %115 = vector.broadcast %114 : vector<8x1xf32> to vector<8x8xf32>
    %116 = arith.mulf %111, %115 : vector<8x8xf32>
    %cst_56 = arith.constant dense<0.000000e+00> : vector<8x16xf32>
    %117 = tpu.matmul %116, %103, %cst_56 {dimension_numbers = #tpu.dot_dimension_numbers<[1], [0], [0], [1], [0, 0, 1, 1], [], []>} : vector<8x8xf32>, vector<8x16xf32>, vector<8x16xf32> -> vector<8x16xf32>
    %118 = tpu.concatenate %100, %117 in 0 : vector<8x16xf32>, vector<8x16xf32> -> vector<16x16xf32>
    %119 = arith.truncf %118 : vector<16x16xf32> to vector<16x16xbf16>
    %c1_57 = arith.constant 1 : index
    %c0_58 = arith.constant 0 : index
    %c0_59 = arith.constant 0 : index
    %120 = vector.load %arg4[%c1_57, %c0_58, %c0_59] : memref<3x16x48xbf16, #tpu.memory_space<vmem>>, vector<1x16x48xbf16>
    %121 = vector.shape_cast %120 : vector<1x16x48xbf16> to vector<16x48xbf16>
    %cst_60 = arith.constant dense<0.000000e+00> : vector<16x48xf32>
    %122 = tpu.matmul %119, %121, %cst_60 {dimension_numbers = #tpu.dot_dimension_numbers<[1], [0], [0], [1], [0, 0, 1, 1], [], []>} : vector<16x16xbf16>, vector<16x48xbf16>, vector<16x48xf32> -> vector<16x48xf32>
    %123 = arith.addf %74, %122 : vector<16x48xf32>
    %c2 = arith.constant 2 : index
    %c0_61 = arith.constant 0 : index
    %c0_62 = arith.constant 0 : index
    %124 = vector.load %arg1[%c2, %c0_61, %c0_62] : memref<3x48x16xbf16, #tpu.memory_space<vmem>>, vector<1x48x16xbf16>
    %125 = vector.shape_cast %124 : vector<1x48x16xbf16> to vector<48x16xbf16>
    %cst_63 = arith.constant dense<0.000000e+00> : vector<16x16xf32>
    %126 = tpu.matmul %24, %125, %cst_63 {dimension_numbers = #tpu.dot_dimension_numbers<[1], [0], [0], [1], [0, 0, 1, 1], [], []>} : vector<16x48xbf16>, vector<48x16xbf16>, vector<16x16xf32> -> vector<16x16xf32>
    %c2_64 = arith.constant 2 : index
    %c0_65 = arith.constant 0 : index
    %c0_66 = arith.constant 0 : index
    %127 = vector.load %arg2[%c2_64, %c0_65, %c0_66] : memref<3x48x16xbf16, #tpu.memory_space<vmem>>, vector<1x48x16xbf16>
    %128 = vector.shape_cast %127 : vector<1x48x16xbf16> to vector<48x16xbf16>
    %cst_67 = arith.constant dense<0.000000e+00> : vector<16x16xf32>
    %129 = tpu.matmul %24, %128, %cst_67 {dimension_numbers = #tpu.dot_dimension_numbers<[1], [0], [0], [1], [0, 0, 1, 1], [], []>} : vector<16x48xbf16>, vector<48x16xbf16>, vector<16x16xf32> -> vector<16x16xf32>
    %c2_68 = arith.constant 2 : index
    %c0_69 = arith.constant 0 : index
    %c0_70 = arith.constant 0 : index
    %130 = vector.load %arg3[%c2_68, %c0_69, %c0_70] : memref<3x48x16xbf16, #tpu.memory_space<vmem>>, vector<1x48x16xbf16>
    %131 = vector.shape_cast %130 : vector<1x48x16xbf16> to vector<48x16xbf16>
    %cst_71 = arith.constant dense<0.000000e+00> : vector<16x16xf32>
    %132 = tpu.matmul %24, %131, %cst_71 {dimension_numbers = #tpu.dot_dimension_numbers<[1], [0], [0], [1], [0, 0, 1, 1], [], []>} : vector<16x48xbf16>, vector<48x16xbf16>, vector<16x16xf32> -> vector<16x16xf32>
    %133 = vector.extract_strided_slice %126 {offsets = [0, 0], sizes = [8, 16], strides = [1, 1]} : vector<16x16xf32> to vector<8x16xf32>
    %134 = vector.extract_strided_slice %129 {offsets = [0, 0], sizes = [8, 16], strides = [1, 1]} : vector<16x16xf32> to vector<8x16xf32>
    %135 = vector.extract_strided_slice %132 {offsets = [0, 0], sizes = [8, 16], strides = [1, 1]} : vector<16x16xf32> to vector<8x16xf32>
    %cst_72 = arith.constant dense<0.000000e+00> : vector<8x8xf32>
    %136 = tpu.matmul %133, %134, %cst_72 {dimension_numbers = #tpu.dot_dimension_numbers<[1], [1], [0], [0], [0, 0, 1, 0], [], []>} : vector<8x16xf32>, vector<8x16xf32>, vector<8x8xf32> -> vector<8x8xf32>
    %cst_73 = arith.constant 2.500000e-01 : f32
    %137 = vector.broadcast %cst_73 : f32 to vector<8x8xf32>
    %138 = arith.mulf %136, %137 : vector<8x8xf32>
    %cst_74 = arith.constant dense<0xFF800000> : vector<8xf32>
    %139 = vector.multi_reduction <maximumf>, %138, %cst_74 [1] : vector<8x8xf32> to vector<8xf32>
    %140 = vector.shape_cast %139 : vector<8xf32> to vector<8x1xf32>
    %141 = vector.broadcast %140 : vector<8x1xf32> to vector<8x8xf32>
    %142 = arith.subf %138, %141 : vector<8x8xf32>
    %143 = math.exp %142 : vector<8x8xf32>
    %cst_75 = arith.constant dense<0.000000e+00> : vector<8xf32>
    %144 = vector.multi_reduction <add>, %143, %cst_75 [1] : vector<8x8xf32> to vector<8xf32>
    %145 = vector.shape_cast %144 : vector<8xf32> to vector<8x1xf32>
    %146 = tpu.reciprocal %145 {approx = true} : vector<8x1xf32> -> vector<8x1xf32>
    %147 = vector.broadcast %146 : vector<8x1xf32> to vector<8x8xf32>
    %148 = arith.mulf %143, %147 : vector<8x8xf32>
    %cst_76 = arith.constant dense<0.000000e+00> : vector<8x16xf32>
    %149 = tpu.matmul %148, %135, %cst_76 {dimension_numbers = #tpu.dot_dimension_numbers<[1], [0], [0], [1], [0, 0, 1, 1], [], []>} : vector<8x8xf32>, vector<8x16xf32>, vector<8x16xf32> -> vector<8x16xf32>
    %150 = vector.extract_strided_slice %126 {offsets = [8, 0], sizes = [8, 16], strides = [1, 1]} : vector<16x16xf32> to vector<8x16xf32>
    %151 = vector.extract_strided_slice %129 {offsets = [8, 0], sizes = [8, 16], strides = [1, 1]} : vector<16x16xf32> to vector<8x16xf32>
    %152 = vector.extract_strided_slice %132 {offsets = [8, 0], sizes = [8, 16], strides = [1, 1]} : vector<16x16xf32> to vector<8x16xf32>
    %cst_77 = arith.constant dense<0.000000e+00> : vector<8x8xf32>
    %153 = tpu.matmul %150, %151, %cst_77 {dimension_numbers = #tpu.dot_dimension_numbers<[1], [1], [0], [0], [0, 0, 1, 0], [], []>} : vector<8x16xf32>, vector<8x16xf32>, vector<8x8xf32> -> vector<8x8xf32>
    %cst_78 = arith.constant 2.500000e-01 : f32
    %154 = vector.broadcast %cst_78 : f32 to vector<8x8xf32>
    %155 = arith.mulf %153, %154 : vector<8x8xf32>
    %cst_79 = arith.constant dense<0xFF800000> : vector<8xf32>
    %156 = vector.multi_reduction <maximumf>, %155, %cst_79 [1] : vector<8x8xf32> to vector<8xf32>
    %157 = vector.shape_cast %156 : vector<8xf32> to vector<8x1xf32>
    %158 = vector.broadcast %157 : vector<8x1xf32> to vector<8x8xf32>
    %159 = arith.subf %155, %158 : vector<8x8xf32>
    %160 = math.exp %159 : vector<8x8xf32>
    %cst_80 = arith.constant dense<0.000000e+00> : vector<8xf32>
    %161 = vector.multi_reduction <add>, %160, %cst_80 [1] : vector<8x8xf32> to vector<8xf32>
    %162 = vector.shape_cast %161 : vector<8xf32> to vector<8x1xf32>
    %163 = tpu.reciprocal %162 {approx = true} : vector<8x1xf32> -> vector<8x1xf32>
    %164 = vector.broadcast %163 : vector<8x1xf32> to vector<8x8xf32>
    %165 = arith.mulf %160, %164 : vector<8x8xf32>
    %cst_81 = arith.constant dense<0.000000e+00> : vector<8x16xf32>
    %166 = tpu.matmul %165, %152, %cst_81 {dimension_numbers = #tpu.dot_dimension_numbers<[1], [0], [0], [1], [0, 0, 1, 1], [], []>} : vector<8x8xf32>, vector<8x16xf32>, vector<8x16xf32> -> vector<8x16xf32>
    %167 = tpu.concatenate %149, %166 in 0 : vector<8x16xf32>, vector<8x16xf32> -> vector<16x16xf32>
    %168 = arith.truncf %167 : vector<16x16xf32> to vector<16x16xbf16>
    %c2_82 = arith.constant 2 : index
    %c0_83 = arith.constant 0 : index
    %c0_84 = arith.constant 0 : index
    %169 = vector.load %arg4[%c2_82, %c0_83, %c0_84] : memref<3x16x48xbf16, #tpu.memory_space<vmem>>, vector<1x16x48xbf16>
    %170 = vector.shape_cast %169 : vector<1x16x48xbf16> to vector<16x48xbf16>
    %cst_85 = arith.constant dense<0.000000e+00> : vector<16x48xf32>
    %171 = tpu.matmul %168, %170, %cst_85 {dimension_numbers = #tpu.dot_dimension_numbers<[1], [0], [0], [1], [0, 0, 1, 1], [], []>} : vector<16x16xbf16>, vector<16x48xbf16>, vector<16x48xf32> -> vector<16x48xf32>
    %172 = arith.addf %123, %171 : vector<16x48xf32>
    %173 = arith.addf %0, %172 : vector<16x48xf32>
    %c0_86 = arith.constant 0 : index
    %c0_87 = arith.constant 0 : index
    %174 = vector.load %arg11[%c0_86, %c0_87] : memref<1x48xf32, #tpu.memory_space<vmem>>, vector<1x48xf32>
    %c0_88 = arith.constant 0 : index
    %c0_89 = arith.constant 0 : index
    %175 = vector.load %arg12[%c0_88, %c0_89] : memref<1x48xf32, #tpu.memory_space<vmem>>, vector<1x48xf32>
    %cst_90 = arith.constant dense<0.000000e+00> : vector<16xf32>
    %176 = vector.multi_reduction <add>, %173, %cst_90 [1] : vector<16x48xf32> to vector<16xf32>
    %177 = vector.shape_cast %176 : vector<16xf32> to vector<16x1xf32>
    %cst_91 = arith.constant 4.800000e+01 : f32
    %178 = vector.broadcast %cst_91 : f32 to vector<16x1xf32>
    %179 = arith.divf %177, %178 : vector<16x1xf32>
    %180 = vector.broadcast %179 : vector<16x1xf32> to vector<16x48xf32>
    %181 = arith.subf %173, %180 : vector<16x48xf32>
    %182 = arith.mulf %181, %181 : vector<16x48xf32>
    %cst_92 = arith.constant dense<0.000000e+00> : vector<16xf32>
    %183 = vector.multi_reduction <add>, %182, %cst_92 [1] : vector<16x48xf32> to vector<16xf32>
    %184 = vector.shape_cast %183 : vector<16xf32> to vector<16x1xf32>
    %cst_93 = arith.constant 0.0212765951 : f32
    %185 = vector.broadcast %cst_93 : f32 to vector<16x1xf32>
    %186 = arith.mulf %184, %185 : vector<16x1xf32>
    %187 = math.sqrt %186 : vector<16x1xf32>
    %cst_94 = arith.constant 9.99999997E-7 : f32
    %188 = vector.broadcast %cst_94 : f32 to vector<16x1xf32>
    %189 = arith.addf %187, %188 : vector<16x1xf32>
    %190 = tpu.reciprocal %189 {approx = true} : vector<16x1xf32> -> vector<16x1xf32>
    %191 = vector.broadcast %190 : vector<16x1xf32> to vector<16x48xf32>
    %192 = arith.mulf %181, %191 : vector<16x48xf32>
    %193 = vector.broadcast %174 : vector<1x48xf32> to vector<16x48xf32>
    %194 = arith.mulf %193, %192 : vector<16x48xf32>
    %195 = vector.broadcast %175 : vector<1x48xf32> to vector<16x48xf32>
    %196 = arith.addf %194, %195 : vector<16x48xf32>
    %197 = arith.truncf %196 : vector<16x48xf32> to vector<16x48xbf16>
    %c0_95 = arith.constant 0 : index
    %c0_96 = arith.constant 0 : index
    %198 = vector.load %arg7[%c0_95, %c0_96] : memref<48x96xbf16, #tpu.memory_space<vmem>>, vector<48x96xbf16>
    %cst_97 = arith.constant dense<0.000000e+00> : vector<16x96xf32>
    %199 = tpu.matmul %197, %198, %cst_97 {dimension_numbers = #tpu.dot_dimension_numbers<[1], [0], [0], [1], [0, 0, 1, 1], [], []>} : vector<16x48xbf16>, vector<48x96xbf16>, vector<16x96xf32> -> vector<16x96xf32>
    %c0_98 = arith.constant 0 : index
    %c0_99 = arith.constant 0 : index
    %200 = vector.load %arg8[%c0_98, %c0_99] : memref<1x96xf32, #tpu.memory_space<vmem>>, vector<1x96xf32>
    %201 = vector.broadcast %200 : vector<1x96xf32> to vector<16x96xf32>
    %202 = arith.addf %199, %201 : vector<16x96xf32>
    %cst_100 = arith.constant 0.000000e+00 : f32
    %203 = vector.broadcast %cst_100 : f32 to vector<16x96xf32>
    %204 = arith.maximumf %202, %203 : vector<16x96xf32>
    %205 = arith.truncf %204 : vector<16x96xf32> to vector<16x96xbf16>
    %c0_101 = arith.constant 0 : index
    %c0_102 = arith.constant 0 : index
    %206 = vector.load %arg9[%c0_101, %c0_102] : memref<96x48xbf16, #tpu.memory_space<vmem>>, vector<96x48xbf16>
    %cst_103 = arith.constant dense<0.000000e+00> : vector<16x48xf32>
    %207 = tpu.matmul %205, %206, %cst_103 {dimension_numbers = #tpu.dot_dimension_numbers<[1], [0], [0], [1], [0, 0, 1, 1], [], []>} : vector<16x96xbf16>, vector<96x48xbf16>, vector<16x48xf32> -> vector<16x48xf32>
    %c0_104 = arith.constant 0 : index
    %c0_105 = arith.constant 0 : index
    %208 = vector.load %arg10[%c0_104, %c0_105] : memref<1x48xf32, #tpu.memory_space<vmem>>, vector<1x48xf32>
    %209 = vector.broadcast %208 : vector<1x48xf32> to vector<16x48xf32>
    %210 = arith.addf %207, %209 : vector<16x48xf32>
    %211 = arith.addf %173, %210 : vector<16x48xf32>
    %c0_106 = arith.constant 0 : index
    %c0_107 = arith.constant 0 : index
    %212 = vector.load %arg13[%c0_106, %c0_107] : memref<16x48xf32, #tpu.memory_space<vmem>>, vector<16x48xf32>
    tpu.vector_store %arg13[%c0_106, %c0_107], %211 {strides = array<i32>} : memref<16x48xf32, #tpu.memory_space<vmem>>, vector<16x48xf32>,
    return
  }
}

</mosaic_0001>

<llo_original>
// kernel: tpu_custom_call.1
$region0: #{tpu_custom_call.1}
  #allocation0 [shape = 'u32[]', space=smem, size = 0x4, offset = 0x4, fixed_abs, tag = 'smem constant byte address 0x4 - core index']
  #allocation1 [shape = 'u32[144,128]{1,0:T(1,128)}', space=vmem, size = 0x12000, scoped, tag = 'internal scratch']
  %s0 = inlined_call_operand.vmem [shape: f32[16,48], index: 0, kind: input, shape index: {}]
  %s1 = inlined_call_operand.vmem [shape: bf16[3,48,16], index: 1, kind: input, shape index: {}]
  %s2 = inlined_call_operand.vmem [shape: bf16[3,48,16], index: 2, kind: input, shape index: {}]
  %s3 = inlined_call_operand.vmem [shape: bf16[3,48,16], index: 3, kind: input, shape index: {}]
  %s4 = inlined_call_operand.vmem [shape: bf16[3,16,48], index: 4, kind: input, shape index: {}]
  %s5 = inlined_call_operand.vmem [shape: f32[1,48], index: 5, kind: input, shape index: {}]
  %s6 = inlined_call_operand.vmem [shape: f32[1,48], index: 6, kind: input, shape index: {}]
  %s7 = inlined_call_operand.vmem [shape: bf16[48,96], index: 7, kind: input, shape index: {}]
  %s8 = inlined_call_operand.vmem [shape: f32[1,96], index: 8, kind: input, shape index: {}]
  %s9 = inlined_call_operand.vmem [shape: bf16[96,48], index: 9, kind: input, shape index: {}]
  %s10 = inlined_call_operand.vmem [shape: f32[1,48], index: 10, kind: input, shape index: {}]
  %s11 = inlined_call_operand.vmem [shape: f32[1,48], index: 11, kind: input, shape index: {}]
  %s12 = inlined_call_operand.vmem [shape: f32[1,48], index: 12, kind: input, shape index: {}]
  %s13 = inlined_call_operand.hbm [shape: f32[16,48], index: 13, kind: output, shape index: {}]
  %s14 = sld [smem:[#allocation0]]
  $region62: #{tpu_custom_call.1} parent=0
    _
  %s16 = ssub.s32 1, %s14
  %s17 = scalar_select 0, %s16, %s14
  $region1: #{tpu_custom_call.1} parent=0
    #allocation2 [shape = 'u8[8192]{0}', space=vmem, size = 0x2000, scoped, tag = 'output window, operand 0, single buffered']
    #allocation3 [shape = 's32[1]{0}', space=sflag, size = 0x4, scoped, tag = 'scoped memory for tpu_custom_call.1']
    %18 = vsyncpa [#allocation3], 0
    // Predicated region
    $region2: #{tpu_custom_call.1} parent=1 // pred_check
      _
    $region3: #{tpu_custom_call.1} parent=1 // pred_check_branch
      %20 = sbr.rel (0) target = $region5
    $region4: #{tpu_custom_call.1} parent=1 // pred_region
      _
    $region5: #{tpu_custom_call.1} parent=1 // pred_fallthru
      _
    // Predicated region
    $region6: #{tpu_custom_call.1} parent=1 // pred_check
      _
    $region7: #{tpu_custom_call.1} parent=1 // pred_check_branch
      %22 = sbr.rel (0) target = $region9
    $region8: #{tpu_custom_call.1} parent=1 // pred_region
      _
    $region9: #{tpu_custom_call.1} parent=1 // pred_fallthru
      _
    // Predicated region
    $region10: #{tpu_custom_call.1} parent=1 // pred_check
      _
    $region11: #{tpu_custom_call.1} parent=1 // pred_check_branch
      %24 = sbr.rel (0) target = $region13
    $region12: #{tpu_custom_call.1} parent=1 // pred_region
      _
    $region13: #{tpu_custom_call.1} parent=1 // pred_fallthru
      _
    // Predicated region
    $region14: #{tpu_custom_call.1} parent=1 // pred_check
      _
    $region15: #{tpu_custom_call.1} parent=1 // pred_check_branch
      %26 = sbr.rel (0) target = $region17
    $region16: #{tpu_custom_call.1} parent=1 // pred_region
      _
    $region17: #{tpu_custom_call.1} parent=1 // pred_fallthru
      _
    // Predicated region
    $region18: #{tpu_custom_call.1} parent=1 // pred_check
      _
    $region19: #{tpu_custom_call.1} parent=1 // pred_check_branch
      %28 = sbr.rel (0) target = $region21
    $region20: #{tpu_custom_call.1} parent=1 // pred_region
      _
    $region21: #{tpu_custom_call.1} parent=1 // pred_fallthru
      _
    // Predicated region
    $region22: #{tpu_custom_call.1} parent=1 // pred_check
      _
    $region23: #{tpu_custom_call.1} parent=1 // pred_check_branch
      %30 = sbr.rel (0) target = $region25
    $region24: #{tpu_custom_call.1} parent=1 // pred_region
      _
    $region25: #{tpu_custom_call.1} parent=1 // pred_fallthru
      _
    // Predicated region
    $region26: #{tpu_custom_call.1} parent=1 // pred_check
      _
    $region27: #{tpu_custom_call.1} parent=1 // pred_check_branch
      %32 = sbr.rel (0) target = $region29
    $region28: #{tpu_custom_call.1} parent=1 // pred_region
      _
    $region29: #{tpu_custom_call.1} parent=1 // pred_fallthru
      _
    // Predicated region
    $region30: #{tpu_custom_call.1} parent=1 // pred_check
      _
    $region31: #{tpu_custom_call.1} parent=1 // pred_check_branch
      %34 = sbr.rel (0) target = $region33
    $region32: #{tpu_custom_call.1} parent=1 // pred_region
      _
    $region33: #{tpu_custom_call.1} parent=1 // pred_fallthru
      _
    // Predicated region
    $region34: #{tpu_custom_call.1} parent=1 // pred_check
      _
    $region35: #{tpu_custom_call.1} parent=1 // pred_check_branch
      %36 = sbr.rel (0) target = $region37
    $region36: #{tpu_custom_call.1} parent=1 // pred_region
      _
    $region37: #{tpu_custom_call.1} parent=1 // pred_fallthru
      _
    // Predicated region
    $region38: #{tpu_custom_call.1} parent=1 // pred_check
      _
    $region39: #{tpu_custom_call.1} parent=1 // pred_check_branch
      %38 = sbr.rel (0) target = $region41
    $region40: #{tpu_custom_call.1} parent=1 // pred_region
      _
    $region41: #{tpu_custom_call.1} parent=1 // pred_fallthru
      _
    // Predicated region
    $region42: #{tpu_custom_call.1} parent=1 // pred_check
      _
    $region43: #{tpu_custom_call.1} parent=1 // pred_check_branch
      %40 = sbr.rel (0) target = $region45
    $region44: #{tpu_custom_call.1} parent=1 // pred_region
      _
    $region45: #{tpu_custom_call.1} parent=1 // pred_fallthru
      _
    // Predicated region
    $region46: #{tpu_custom_call.1} parent=1 // pred_check
      _
    $region47: #{tpu_custom_call.1} parent=1 // pred_check_branch
      %42 = sbr.rel (0) target = $region49
    $region48: #{tpu_custom_call.1} parent=1 // pred_region
      _
    $region49: #{tpu_custom_call.1} parent=1 // pred_fallthru
      _
    // Predicated region
    $region50: #{tpu_custom_call.1} parent=1 // pred_check
      _
    $region51: #{tpu_custom_call.1} parent=1 // pred_check_branch
      %44 = sbr.rel (0) target = $region53
    $region52: #{tpu_custom_call.1} parent=1 // pred_region
      _
    $region53: #{tpu_custom_call.1} parent=1 // pred_fallthru
      _
    %v46 = vld [vmem:[%s0] sm:$0xff]
    %v47 = vld [vmem:[%s0 + $0x8] sm:$0xff]
    %v48 = vld [vmem:[%s5] sm:$0x1]
    %v49 = vld [vmem:[%s6] sm:$0x1]
    %vm50 = vcmask 392192
    %v51 = vsel %vm50, %v46, 0.0
    %52 = vadd.xlane.f32.xlu0 %v51
    %v53 = vpop.xlane.xlu0 %52
    %v54 = vsel %vm50, %v47, 0.0
    %55 = vadd.xlane.f32.xlu0 %v54
    %v56 = vpop.xlane.xlu0 %55
    %v57 = vrcp.pop 48.0
    %v58 = vmul.f32 %v53, %v57
    %v59 = vmul.f32 %v56, %v57
    %v60 = vsub.f32 %v46, %v58
    %v61 = vsub.f32 %v47, %v59
    %v62 = vmul.f32 %v60, %v60
    %v63 = vmul.f32 %v61, %v61
    %v64 = vsel %vm50, %v62, 0.0
    %65 = vadd.xlane.f32.xlu0 %v64
    %v66 = vpop.xlane.xlu0 %65
    %v67 = vsel %vm50, %v63, 0.0
    %68 = vadd.xlane.f32.xlu0 %v67
    %v69 = vpop.xlane.xlu0 %68
    %v70 = vmul.f32 %v66, 0.021276595
    %v71 = vmul.f32 %v69, 0.021276595
    %v72 = vrsqrt.pop %v70
    %v73 = vmul.f32 %v70, %v72
    %vm74 = vcmp.eq.f32.partialorder %v70, inf
    %v75 = vsel %vm74, %v70, %v73
    %vm76 = vcmp.eq.f32.partialorder %v70, 0.0
    %v77 = vand.u32 %v70, 2147483648
    %v78 = vsel %vm76, %v77, %v75
    %v79 = vrsqrt.pop %v71
    %v80 = vmul.f32 %v71, %v79
    %vm81 = vcmp.eq.f32.partialorder %v71, inf
    %v82 = vsel %vm81, %v71, %v80
    %vm83 = vcmp.eq.f32.partialorder %v71, 0.0
    %v84 = vand.u32 %v71, 2147483648
    %v85 = vsel %vm83, %v84, %v82
    %v86 = vadd.f32 %v78, 1e-06
    %v87 = vadd.f32 %v85, 1e-06
    %v88 = vrcp.pop %v86
    %v89 = vrcp.pop %v87
    %v90 = vmul.f32 %v60, %v88
    %v91 = vmul.f32 %v61, %v89
    %v93 = vlaneseq
    %v94 = vshrl.u32 %v93, 7
    %v95 = vsub.s32 0, %v94
    %v96 = vrot.slane %v48, %v95
    %v98 = vmul.f32 %v96, %v90
    %v99 = vmul.f32 %v96, %v91
    %v101 = vlaneseq
    %v102 = vshrl.u32 %v101, 7
    %v103 = vsub.s32 0, %v102
    %v104 = vrot.slane %v49, %v103
    %v106 = vadd.f32 %v98, %v104
    %v107 = vadd.f32 %v99, %v104
    %v108 = vpack.c.bf16 %v107, %v106
    %v109 = vld [vmem:[%s1] sm:$0xf]
    %v110 = vld [vmem:[%s1 + $0x4] sm:$0xf]
    %v111 = vld [vmem:[%s1 + $0x8] sm:$0xf]
    %v112 = vld [vmem:[%s1 + $0xc] sm:$0xf]
    %v113 = vld [vmem:[%s1 + $0x10] sm:$0xf]
    %v114 = vld [vmem:[%s1 + $0x14] sm:$0xf]
    %v121 = vunpack.c.l.b16 %v109
    %v122 = vunpack.c.l.b16 %v110
    %v123 = vunpack.c.l.b16 %v111
    %v124 = vunpack.c.l.b16 %v112
    %v125 = vunpack.c.l.b16 %v113
    %v126 = vunpack.c.l.b16 %v114
    %v127 = vpack.c.b16 %v122, %v121
    %v128 = vpack.c.b16 %v124, %v123
    %v129 = vpack.c.b16 %v126, %v125
    %v134 = vsel %vm50, %v108, 0
    %136 = vmatprep.subr.bf16.mxu0 0
    %137 = vmatpush1.bf16.msra.mxu0 %v127
    %138 = vmatprep.subr.bf16.mxu0 0
    %139 = vmatpush1.bf16.msra.mxu0 %v128
    %140 = vmatprep.subr.bf16.mxu0 0
    %141 = vmatpush1.bf16.msra.mxu0 %v129
    %142 = vmatprep.subr.bf16.mxu0 0
    %143 = vmatpush1.bf16.msra.mxu0 0
    %144 = vmatprep.subr.bf16.mxu0 0
    %145 = vmatpush1.bf16.msra.mxu0 0
    %146 = vmatprep.subr.bf16.mxu0 0
    %147 = vmatpush1.bf16.msra.mxu0 0
    %148 = vmatprep.subr.bf16.mxu0 0
    %149 = vmatpush1.bf16.msra.mxu0 0
    %150 = vmatprep.subr.bf16.mxu0 0
    %151 = vmatpush1.bf16.msra.mxu0 0
    %152 = vmatprep.subr.bf16.mxu0 0
    %153 = vmatpush1.bf16.msra.mxu0 0
    %154 = vmatprep.subr.bf16.mxu0 0
    %155 = vmatpush1.bf16.msra.mxu0 0
    %156 = vmatprep.subr.bf16.mxu0 0
    %157 = vmatpush1.bf16.msra.mxu0 0
    %158 = vmatprep.subr.bf16.mxu0 0
    %159 = vmatpush1.bf16.msra.mxu0 0
    %160 = vmatprep.subr.bf16.mxu0 0
    %161 = vmatpush1.bf16.msra.mxu0 0
    %162 = vmatprep.subr.bf16.mxu0 0
    %163 = vmatpush1.bf16.msra.mxu0 0
    %164 = vmatprep.subr.bf16.mxu0 0
    %165 = vmatpush1.bf16.msra.mxu0 0
    %166 = vmatprep.subr.bf16.mxu0 0
    %167 = vmatpush1.bf16.msra.mxu0 0
    %168 = vmatprep.mubr.bf16.mxu0 0
    %169 = vmatmul.mubr.bf16.gmra.mrb[0].mxu0 %v134
    %v170 = vpop.f32.mrb[0].mxu0
    %v171 = vadd.f32 0.0, %v170
    %v172 = vpop.f32.mrb[0].mxu0
    %v173 = vpop.f32.mrb[0].mxu0
    %v174 = vadd.f32 0.0, %v173
    %v175 = vpop.f32.mrb[0].mxu0
    %176 = vdwg.mxu0
    %v177 = vld [vmem:[%s2] sm:$0xf]
    %v178 = vld [vmem:[%s2 + $0x4] sm:$0xf]
    %v179 = vld [vmem:[%s2 + $0x8] sm:$0xf]
    %v180 = vld [vmem:[%s2 + $0xc] sm:$0xf]
    %v181 = vld [vmem:[%s2 + $0x10] sm:$0xf]
    %v182 = vld [vmem:[%s2 + $0x14] sm:$0xf]
    %v189 = vunpack.c.l.b16 %v177
    %v190 = vunpack.c.l.b16 %v178
    %v191 = vunpack.c.l.b16 %v179
    %v192 = vunpack.c.l.b16 %v180
    %v193 = vunpack.c.l.b16 %v181
    %v194 = vunpack.c.l.b16 %v182
    %v195 = vpack.c.b16 %v190, %v189
    %v196 = vpack.c.b16 %v192, %v191
    %v197 = vpack.c.b16 %v194, %v193
    %201 = vmatprep.subr.bf16.mxu0 0
    %202 = vmatpush1.bf16.msra.mxu0 %v195
    %203 = vmatprep.subr.bf16.mxu0 0
    %204 = vmatpush1.bf16.msra.mxu0 %v196
    %205 = vmatprep.subr.bf16.mxu0 0
    %206 = vmatpush1.bf16.msra.mxu0 %v197
    %207 = vmatprep.subr.bf16.mxu0 0
    %208 = vmatpush1.bf16.msra.mxu0 0
    %209 = vmatprep.subr.bf16.mxu0 0
    %210 = vmatpush1.bf16.msra.mxu0 0
    %211 = vmatprep.subr.bf16.mxu0 0
    %212 = vmatpush1.bf16.msra.mxu0 0
    %213 = vmatprep.subr.bf16.mxu0 0
    %214 = vmatpush1.bf16.msra.mxu0 0
    %215 = vmatprep.subr.bf16.mxu0 0
    %216 = vmatpush1.bf16.msra.mxu0 0
    %217 = vmatprep.subr.bf16.mxu0 0
    %218 = vmatpush1.bf16.msra.mxu0 0
    %219 = vmatprep.subr.bf16.mxu0 0
    %220 = vmatpush1.bf16.msra.mxu0 0
    %221 = vmatprep.subr.bf16.mxu0 0
    %222 = vmatpush1.bf16.msra.mxu0 0
    %223 = vmatprep.subr.bf16.mxu0 0
    %224 = vmatpush1.bf16.msra.mxu0 0
    %225 = vmatprep.subr.bf16.mxu0 0
    %226 = vmatpush1.bf16.msra.mxu0 0
    %227 = vmatprep.subr.bf16.mxu0 0
    %228 = vmatpush1.bf16.msra.mxu0 0
    %229 = vmatprep.subr.bf16.mxu0 0
    %230 = vmatpush1.bf16.msra.mxu0 0
    %231 = vmatprep.subr.bf16.mxu0 0
    %232 = vmatpush1.bf16.msra.mxu0 0
    %233 = vmatprep.mubr.bf16.mxu0 0
    %234 = vmatmul.mubr.bf16.gmra.mrb[0].mxu0 %v134
    %v235 = vpop.f32.mrb[0].mxu0
    %v236 = vadd.f32 0.0, %v235
    %v237 = vpop.f32.mrb[0].mxu0
    %v238 = vpop.f32.mrb[0].mxu0
    %v239 = vadd.f32 0.0, %v238
    %v240 = vpop.f32.mrb[0].mxu0
    %241 = vdwg.mxu0
    %v242 = vld [vmem:[%s3] sm:$0xf]
    %v243 = vld [vmem:[%s3 + $0x4] sm:$0xf]
    %v244 = vld [vmem:[%s3 + $0x8] sm:$0xf]
    %v245 = vld [vmem:[%s3 + $0xc] sm:$0xf]
    %v246 = vld [vmem:[%s3 + $0x10] sm:$0xf]
    %v247 = vld [vmem:[%s3 + $0x14] sm:$0xf]
    %v254 = vunpack.c.l.b16 %v242
    %v255 = vunpack.c.l.b16 %v243
    %v256 = vunpack.c.l.b16 %v244
    %v257 = vunpack.c.l.b16 %v245
    %v258 = vunpack.c.l.b16 %v246
    %v259 = vunpack.c.l.b16 %v247
    %v260 = vpack.c.b16 %v255, %v254
    %v261 = vpack.c.b16 %v257, %v256
    %v262 = vpack.c.b16 %v259, %v258
    %266 = vmatprep.subr.bf16.mxu0 0
    %267 = vmatpush1.bf16.msra.mxu0 %v260
    %268 = vmatprep.subr.bf16.mxu0 0
    %269 = vmatpush1.bf16.msra.mxu0 %v261
    %270 = vmatprep.subr.bf16.mxu0 0
    %271 = vmatpush1.bf16.msra.mxu0 %v262
    %272 = vmatprep.subr.bf16.mxu0 0
    %273 = vmatpush1.bf16.msra.mxu0 0
    %274 = vmatprep.subr.bf16.mxu0 0
    %275 = vmatpush1.bf16.msra.mxu0 0
    %276 = vmatprep.subr.bf16.mxu0 0
    %277 = vmatpush1.bf16.msra.mxu0 0
    %278 = vmatprep.subr.bf16.mxu0 0
    %279 = vmatpush1.bf16.msra.mxu0 0
    %280 = vmatprep.subr.bf16.mxu0 0
    %281 = vmatpush1.bf16.msra.mxu0 0
    %282 = vmatprep.subr.bf16.mxu0 0
    %283 = vmatpush1.bf16.msra.mxu0 0
    %284 = vmatprep.subr.bf16.mxu0 0
    %285 = vmatpush1.bf16.msra.mxu0 0
    %286 = vmatprep.subr.bf16.mxu0 0
    %287 = vmatpush1.bf16.msra.mxu0 0
    %288 = vmatprep.subr.bf16.mxu0 0
    %289 = vmatpush1.bf16.msra.mxu0 0
    %290 = vmatprep.subr.bf16.mxu0 0
    %291 = vmatpush1.bf16.msra.mxu0 0
    %292 = vmatprep.subr.bf16.mxu0 0
    %293 = vmatpush1.bf16.msra.mxu0 0
    %294 = vmatprep.subr.bf16.mxu0 0
    %295 = vmatpush1.bf16.msra.mxu0 0
    %296 = vmatprep.subr.bf16.mxu0 0
    %297 = vmatpush1.bf16.msra.mxu0 0
    %298 = vmatprep.mubr.bf16.mxu0 0
    %299 = vmatmul.mubr.bf16.gmra.mrb[0].mxu0 %v134
    %v300 = vpop.f32.mrb[0].mxu0
    %v301 = vadd.f32 0.0, %v300
    %v302 = vpop.f32.mrb[0].mxu0
    %v303 = vpop.f32.mrb[0].mxu0
    %v304 = vadd.f32 0.0, %v303
    %v305 = vpop.f32.mrb[0].mxu0
    %306 = vdwg.mxu0
    %vm307 = vcmask 130048
    %v309 = vsel %vm307, %v171, 0
    %v312 = vsel %vm307, %v236, 0
    %314 = vmatprep.subr.mxu0 0.0
    %315 = vmatpush1.xpose.msra.mxu0 %v312
    %316 = vmatprep.subr.mxu0 0.0
    %317 = vmatpush1.xpose.msra.mxu0 0.0
    %318 = vmatprep.subr.mxu0 0.0
    %319 = vmatpush1.xpose.msra.mxu0 0.0
    %320 = vmatprep.subr.mxu0 0.0
    %321 = vmatpush1.xpose.msra.mxu0 0.0
    %322 = vmatprep.subr.mxu0 0.0
    %323 = vmatpush1.xpose.msra.mxu0 0.0
    %324 = vmatprep.subr.mxu0 0.0
    %325 = vmatpush1.xpose.msra.mxu0 0.0
    %326 = vmatprep.subr.mxu0 0.0
    %327 = vmatpush1.xpose.msra.mxu0 0.0
    %328 = vmatprep.subr.mxu0 0.0
    %329 = vmatpush1.xpose.msra.mxu0 0.0
    %330 = vmatprep.subr.mxu0 0.0
    %331 = vmatpush1.xpose.msra.mxu0 0.0
    %332 = vmatprep.subr.mxu0 0.0
    %333 = vmatpush1.xpose.msra.mxu0 0.0
    %334 = vmatprep.subr.mxu0 0.0
    %335 = vmatpush1.xpose.msra.mxu0 0.0
    %336 = vmatprep.subr.mxu0 0.0
    %337 = vmatpush1.xpose.msra.mxu0 0.0
    %338 = vmatprep.subr.mxu0 0.0
    %339 = vmatpush1.xpose.msra.mxu0 0.0
    %340 = vmatprep.subr.mxu0 0.0
    %341 = vmatpush1.xpose.msra.mxu0 0.0
    %342 = vmatprep.subr.mxu0 0.0
    %343 = vmatpush1.xpose.msra.mxu0 0.0
    %344 = vmatprep.subr.mxu0 0.0
    %345 = vmatpush1.xpose.msra.mxu0 0.0
    %346 = vmatprep.subr.mxu0 0.0
    %347 = vmatpush1.xpose.msra.mxu0 0.0
    %348 = vmatprep.subr.mxu0 0.0
    %349 = vmatpush1.xpose.msra.mxu0 0.0
    %350 = vmatprep.subr.mxu0 0.0
    %351 = vmatpush1.xpose.msra.mxu0 0.0
    %352 = vmatprep.subr.mxu0 0.0
    %353 = vmatpush1.xpose.msra.mxu0 0.0
    %354 = vmatprep.subr.mxu0 0.0
    %355 = vmatpush1.xpose.msra.mxu0 0.0
    %356 = vmatprep.subr.mxu0 0.0
    %357 = vmatpush1.xpose.msra.mxu0 0.0
    %358 = vmatprep.subr.mxu0 0.0
    %359 = vmatpush1.xpose.msra.mxu0 0.0
    %360 = vmatprep.subr.mxu0 0.0
    %361 = vmatpush1.xpose.msra.mxu0 0.0
    %362 = vmatprep.subr.mxu0 0.0
    %363 = vmatpush1.xpose.msra.mxu0 0.0
    %364 = vmatprep.subr.mxu0 0.0
    %365 = vmatpush1.xpose.msra.mxu0 0.0
    %366 = vmatprep.subr.mxu0 0.0
    %367 = vmatpush1.xpose.msra.mxu0 0.0
    %368 = vmatprep.subr.mxu0 0.0
    %369 = vmatpush1.xpose.msra.mxu0 0.0
    %370 = vmatprep.subr.mxu0 0.0
    %371 = vmatpush1.xpose.msra.mxu0 0.0
    %372 = vmatprep.subr.mxu0 0.0
    %373 = vmatpush1.xpose.msra.mxu0 0.0
    %374 = vmatprep.subr.mxu0 0.0
    %375 = vmatpush1.xpose.msra.mxu0 0.0
    %376 = vmatprep.subr.mxu0 0.0
    %377 = vmatpush1.xpose.msra.mxu0 0.0
    %378 = vmatprep.mubr.f32.mxu0 0.0
    %379 = vmatmul.mubr.f32.gmra.mrb[0].mxu0 %v309
    %v380 = vpop.f32.mrb[0].mxu0
    %v381 = vadd.f32 0.0, %v380
    %v382 = vpop.f32.mrb[0].mxu0
    %383 = vdwg.mxu0
    %v384 = vmul.f32 %v381, 0.25
    %vm385 = vcmask 64512
    %v386 = vsel %vm385, %v384, -inf
    %387 = vmax.xlane.f32.xlu0 %v386
    %v388 = vpop.xlane.xlu0 %387
    %v389 = vsub.f32 %v384, %v388
    %v390 = vmul.f32 %v389, 1.442695
    %v391 = vpow.pop %v390
    %v392 = vsel %vm385, %v391, 0.0
    %393 = vadd.xlane.f32.xlu0 %v392
    %v394 = vpop.xlane.xlu0 %393
    %v395 = vrcp.pop %v394
    %v396 = vmul.f32 %v391, %v395
    %v398 = vsel %vm385, %v396, 0
    %400 = vmatprep.subr.mxu0 0.0
    %401 = vmatpush1.msra.mxu0 %v301
    %402 = vmatprep.subr.mxu0 0.0
    %403 = vmatpush1.msra.mxu0 0.0
    %404 = vmatprep.subr.mxu0 0.0
    %405 = vmatpush1.msra.mxu0 0.0
    %406 = vmatprep.subr.mxu0 0.0
    %407 = vmatpush1.msra.mxu0 0.0
    %408 = vmatprep.subr.mxu0 0.0
    %409 = vmatpush1.msra.mxu0 0.0
    %410 = vmatprep.subr.mxu0 0.0
    %411 = vmatpush1.msra.mxu0 0.0
    %412 = vmatprep.subr.mxu0 0.0
    %413 = vmatpush1.msra.mxu0 0.0
    %414 = vmatprep.subr.mxu0 0.0
    %415 = vmatpush1.msra.mxu0 0.0
    %416 = vmatprep.subr.mxu0 0.0
    %417 = vmatpush1.msra.mxu0 0.0
    %418 = vmatprep.subr.mxu0 0.0
    %419 = vmatpush1.msra.mxu0 0.0
    %420 = vmatprep.subr.mxu0 0.0
    %421 = vmatpush1.msra.mxu0 0.0
    %422 = vmatprep.subr.mxu0 0.0
    %423 = vmatpush1.msra.mxu0 0.0
    %424 = vmatprep.subr.mxu0 0.0
    %425 = vmatpush1.msra.mxu0 0.0
    %426 = vmatprep.subr.mxu0 0.0
    %427 = vmatpush1.msra.mxu0 0.0
    %428 = vmatprep.subr.mxu0 0.0
    %429 = vmatpush1.msra.mxu0 0.0
    %430 = vmatprep.subr.mxu0 0.0
    %431 = vmatpush1.msra.mxu0 0.0
    %432 = vmatprep.subr.mxu0 0.0
    %433 = vmatpush1.msra.mxu0 0.0
    %434 = vmatprep.subr.mxu0 0.0
    %435 = vmatpush1.msra.mxu0 0.0
    %436 = vmatprep.subr.mxu0 0.0
    %437 = vmatpush1.msra.mxu0 0.0
    %438 = vmatprep.subr.mxu0 0.0
    %439 = vmatpush1.msra.mxu0 0.0
    %440 = vmatprep.subr.mxu0 0.0
    %441 = vmatpush1.msra.mxu0 0.0
    %442 = vmatprep.subr.mxu0 0.0
    %443 = vmatpush1.msra.mxu0 0.0
    %444 = vmatprep.subr.mxu0 0.0
    %445 = vmatpush1.msra.mxu0 0.0
    %446 = vmatprep.subr.mxu0 0.0
    %447 = vmatpush1.msra.mxu0 0.0
    %448 = vmatprep.subr.mxu0 0.0
    %449 = vmatpush1.msra.mxu0 0.0
    %450 = vmatprep.subr.mxu0 0.0
    %451 = vmatpush1.msra.mxu0 0.0
    %452 = vmatprep.subr.mxu0 0.0
    %453 = vmatpush1.msra.mxu0 0.0
    %454 = vmatprep.subr.mxu0 0.0
    %455 = vmatpush1.msra.mxu0 0.0
    %456 = vmatprep.subr.mxu0 0.0
    %457 = vmatpush1.msra.mxu0 0.0
    %458 = vmatprep.subr.mxu0 0.0
    %459 = vmatpush1.msra.mxu0 0.0
    %460 = vmatprep.subr.mxu0 0.0
    %461 = vmatpush1.msra.mxu0 0.0
    %462 = vmatprep.subr.mxu0 0.0
    %463 = vmatpush1.msra.mxu0 0.0
    %464 = vmatprep.mubr.f32.mxu0 0.0
    %465 = vmatmul.mubr.f32.gmra.mrb[0].mxu0 %v398
    %v466 = vpop.f32.mrb[0].mxu0
    %v467 = vadd.f32 0.0, %v466
    %v468 = vpop.f32.mrb[0].mxu0
    %469 = vdwg.mxu0
    %v471 = vsel %vm307, %v174, 0
    %v474 = vsel %vm307, %v239, 0
    %476 = vmatprep.subr.mxu0 0.0
    %477 = vmatpush1.xpose.msra.mxu0 %v474
    %478 = vmatprep.subr.mxu0 0.0
    %479 = vmatpush1.xpose.msra.mxu0 0.0
    %480 = vmatprep.subr.mxu0 0.0
    %481 = vmatpush1.xpose.msra.mxu0 0.0
    %482 = vmatprep.subr.mxu0 0.0
    %483 = vmatpush1.xpose.msra.mxu0 0.0
    %484 = vmatprep.subr.mxu0 0.0
    %485 = vmatpush1.xpose.msra.mxu0 0.0
    %486 = vmatprep.subr.mxu0 0.0
    %487 = vmatpush1.xpose.msra.mxu0 0.0
    %488 = vmatprep.subr.mxu0 0.0
    %489 = vmatpush1.xpose.msra.mxu0 0.0
    %490 = vmatprep.subr.mxu0 0.0
    %491 = vmatpush1.xpose.msra.mxu0 0.0
    %492 = vmatprep.subr.mxu0 0.0
    %493 = vmatpush1.xpose.msra.mxu0 0.0
    %494 = vmatprep.subr.mxu0 0.0
    %495 = vmatpush1.xpose.msra.mxu0 0.0
    %496 = vmatprep.subr.mxu0 0.0
    %497 = vmatpush1.xpose.msra.mxu0 0.0
    %498 = vmatprep.subr.mxu0 0.0
    %499 = vmatpush1.xpose.msra.mxu0 0.0
    %500 = vmatprep.subr.mxu0 0.0
    %501 = vmatpush1.xpose.msra.mxu0 0.0
    %502 = vmatprep.subr.mxu0 0.0
    %503 = vmatpush1.xpose.msra.mxu0 0.0
    %504 = vmatprep.subr.mxu0 0.0
    %505 = vmatpush1.xpose.msra.mxu0 0.0
    %506 = vmatprep.subr.mxu0 0.0
    %507 = vmatpush1.xpose.msra.mxu0 0.0
    %508 = vmatprep.subr.mxu0 0.0
    %509 = vmatpush1.xpose.msra.mxu0 0.0
    %510 = vmatprep.subr.mxu0 0.0
    %511 = vmatpush1.xpose.msra.mxu0 0.0
    %512 = vmatprep.subr.mxu0 0.0
    %513 = vmatpush1.xpose.msra.mxu0 0.0
    %514 = vmatprep.subr.mxu0 0.0
    %515 = vmatpush1.xpose.msra.mxu0 0.0
    %516 = vmatprep.subr.mxu0 0.0
    %517 = vmatpush1.xpose.msra.mxu0 0.0
    %518 = vmatprep.subr.mxu0 0.0
    %519 = vmatpush1.xpose.msra.mxu0 0.0
    %520 = vmatprep.subr.mxu0 0.0
    %521 = vmatpush1.xpose.msra.mxu0 0.0
    %522 = vmatprep.subr.mxu0 0.0
    %523 = vmatpush1.xpose.msra.mxu0 0.0
    %524 = vmatprep.subr.mxu0 0.0
    %525 = vmatpush1.xpose.msra.mxu0 0.0
    %526 = vmatprep.subr.mxu0 0.0
    %527 = vmatpush1.xpose.msra.mxu0 0.0
    %528 = vmatprep.subr.mxu0 0.0
    %529 = vmatpush1.xpose.msra.mxu0 0.0
    %530 = vmatprep.subr.mxu0 0.0
    %531 = vmatpush1.xpose.msra.mxu0 0.0
    %532 = vmatprep.subr.mxu0 0.0
    %533 = vmatpush1.xpose.msra.mxu0 0.0
    %534 = vmatprep.subr.mxu0 0.0
    %535 = vmatpush1.xpose.msra.mxu0 0.0
    %536 = vmatprep.subr.mxu0 0.0
    %537 = vmatpush1.xpose.msra.mxu0 0.0
    %538 = vmatprep.subr.mxu0 0.0
    %539 = vmatpush1.xpose.msra.mxu0 0.0
    %540 = vmatprep.mubr.f32.mxu0 0.0
    %541 = vmatmul.mubr.f32.gmra.mrb[0].mxu0 %v471
    %v542 = vpop.f32.mrb[0].mxu0
    %v543 = vadd.f32 0.0, %v542
    %v544 = vpop.f32.mrb[0].mxu0
    %545 = vdwg.mxu0
    %v546 = vmul.f32 %v543, 0.25
    %v547 = vsel %vm385, %v546, -inf
    %548 = vmax.xlane.f32.xlu0 %v547
    %v549 = vpop.xlane.xlu0 %548
    %v550 = vsub.f32 %v546, %v549
    %v551 = vmul.f32 %v550, 1.442695
    %v552 = vpow.pop %v551
    %v553 = vsel %vm385, %v552, 0.0
    %554 = vadd.xlane.f32.xlu0 %v553
    %v555 = vpop.xlane.xlu0 %554
    %v556 = vrcp.pop %v555
    %v557 = vmul.f32 %v552, %v556
    %v559 = vsel %vm385, %v557, 0
    %561 = vmatprep.subr.mxu0 0.0
    %562 = vmatpush1.msra.mxu0 %v304
    %563 = vmatprep.subr.mxu0 0.0
    %564 = vmatpush1.msra.mxu0 0.0
    %565 = vmatprep.subr.mxu0 0.0
    %566 = vmatpush1.msra.mxu0 0.0
    %567 = vmatprep.subr.mxu0 0.0
    %568 = vmatpush1.msra.mxu0 0.0
    %569 = vmatprep.subr.mxu0 0.0
    %570 = vmatpush1.msra.mxu0 0.0
    %571 = vmatprep.subr.mxu0 0.0
    %572 = vmatpush1.msra.mxu0 0.0
    %573 = vmatprep.subr.mxu0 0.0
    %574 = vmatpush1.msra.mxu0 0.0
    %575 = vmatprep.subr.mxu0 0.0
    %576 = vmatpush1.msra.mxu0 0.0
    %577 = vmatprep.subr.mxu0 0.0
    %578 = vmatpush1.msra.mxu0 0.0
    %579 = vmatprep.subr.mxu0 0.0
    %580 = vmatpush1.msra.mxu0 0.0
    %581 = vmatprep.subr.mxu0 0.0
    %582 = vmatpush1.msra.mxu0 0.0
    %583 = vmatprep.subr.mxu0 0.0
    %584 = vmatpush1.msra.mxu0 0.0
    %585 = vmatprep.subr.mxu0 0.0
    %586 = vmatpush1.msra.mxu0 0.0
    %587 = vmatprep.subr.mxu0 0.0
    %588 = vmatpush1.msra.mxu0 0.0
    %589 = vmatprep.subr.mxu0 0.0
    %590 = vmatpush1.msra.mxu0 0.0
    %591 = vmatprep.subr.mxu0 0.0
    %592 = vmatpush1.msra.mxu0 0.0
    %593 = vmatprep.subr.mxu0 0.0
    %594 = vmatpush1.msra.mxu0 0.0
    %595 = vmatprep.subr.mxu0 0.0
    %596 = vmatpush1.msra.mxu0 0.0
    %597 = vmatprep.subr.mxu0 0.0
    %598 = vmatpush1.msra.mxu0 0.0
    %599 = vmatprep.subr.mxu0 0.0
    %600 = vmatpush1.msra.mxu0 0.0
    %601 = vmatprep.subr.mxu0 0.0
    %602 = vmatpush1.msra.mxu0 0.0
    %603 = vmatprep.subr.mxu0 0.0
    %604 = vmatpush1.msra.mxu0 0.0
    %605 = vmatprep.subr.mxu0 0.0
    %606 = vmatpush1.msra.mxu0 0.0
    %607 = vmatprep.subr.mxu0 0.0
    %608 = vmatpush1.msra.mxu0 0.0
    %609 = vmatprep.subr.mxu0 0.0
    %610 = vmatpush1.msra.mxu0 0.0
    %611 = vmatprep.subr.mxu0 0.0
    %612 = vmatpush1.msra.mxu0 0.0
    %613 = vmatprep.subr.mxu0 0.0
    %614 = vmatpush1.msra.mxu0 0.0
    %615 = vmatprep.subr.mxu0 0.0
    %616 = vmatpush1.msra.mxu0 0.0
    %617 = vmatprep.subr.mxu0 0.0
    %618 = vmatpush1.msra.mxu0 0.0
    %619 = vmatprep.subr.mxu0 0.0
    %620 = vmatpush1.msra.mxu0 0.0
    %621 = vmatprep.subr.mxu0 0.0
    %622 = vmatpush1.msra.mxu0 0.0
    %623 = vmatprep.subr.mxu0 0.0
    %624 = vmatpush1.msra.mxu0 0.0
    %625 = vmatprep.mubr.f32.mxu0 0.0
    %626 = vmatmul.mubr.f32.gmra.mrb[0].mxu0 %v559
    %v627 = vpop.f32.mrb[0].mxu0
    %v628 = vadd.f32 0.0, %v627
    %v629 = vpop.f32.mrb[0].mxu0
    %630 = vdwg.mxu0
    %v631 = vpack.c.bf16 %v628, %v467
    %v632 = vld [vmem:[%s4] sm:$0xf]
    %v633 = vld [vmem:[%s4 + $0x4] sm:$0xf]
    %s634 = scalar_lea.vmem %s1, 24
    %v635 = vld [vmem:[%s634] sm:$0xf]
    %v636 = vld [vmem:[%s634 + $0x4] sm:$0xf]
    %v637 = vld [vmem:[%s634 + $0x8] sm:$0xf]
    %v638 = vld [vmem:[%s634 + $0xc] sm:$0xf]
    %v639 = vld [vmem:[%s634 + $0x10] sm:$0xf]
    %v640 = vld [vmem:[%s634 + $0x14] sm:$0xf]
    %v647 = vunpack.c.l.b16 %v635
    %v648 = vunpack.c.l.b16 %v636
    %v649 = vunpack.c.l.b16 %v637
    %v650 = vunpack.c.l.b16 %v638
    %v651 = vunpack.c.l.b16 %v639
    %v652 = vunpack.c.l.b16 %v640
    %v653 = vpack.c.b16 %v648, %v647
    %v654 = vpack.c.b16 %v650, %v649
    %v655 = vpack.c.b16 %v652, %v651
    %659 = vmatprep.subr.bf16.mxu0 0
    %660 = vmatpush1.bf16.msra.mxu0 %v653
    %661 = vmatprep.subr.bf16.mxu0 0
    %662 = vmatpush1.bf16.msra.mxu0 %v654
    %663 = vmatprep.subr.bf16.mxu0 0
    %664 = vmatpush1.bf16.msra.mxu0 %v655
    %665 = vmatprep.subr.bf16.mxu0 0
    %666 = vmatpush1.bf16.msra.mxu0 0
    %667 = vmatprep.subr.bf16.mxu0 0
    %668 = vmatpush1.bf16.msra.mxu0 0
    %669 = vmatprep.subr.bf16.mxu0 0
    %670 = vmatpush1.bf16.msra.mxu0 0
    %671 = vmatprep.subr.bf16.mxu0 0
    %672 = vmatpush1.bf16.msra.mxu0 0
    %673 = vmatprep.subr.bf16.mxu0 0
    %674 = vmatpush1.bf16.msra.mxu0 0
    %675 = vmatprep.subr.bf16.mxu0 0
    %676 = vmatpush1.bf16.msra.mxu0 0
    %677 = vmatprep.subr.bf16.mxu0 0
    %678 = vmatpush1.bf16.msra.mxu0 0
    %679 = vmatprep.subr.bf16.mxu0 0
    %680 = vmatpush1.bf16.msra.mxu0 0
    %681 = vmatprep.subr.bf16.mxu0 0
    %682 = vmatpush1.bf16.msra.mxu0 0
    %683 = vmatprep.subr.bf16.mxu0 0
    %684 = vmatpush1.bf16.msra.mxu0 0
    %685 = vmatprep.subr.bf16.mxu0 0
    %686 = vmatpush1.bf16.msra.mxu0 0
    %687 = vmatprep.subr.bf16.mxu0 0
    %688 = vmatpush1.bf16.msra.mxu0 0
    %689 = vmatprep.subr.bf16.mxu0 0
    %690 = vmatpush1.bf16.msra.mxu0 0
    %691 = vmatprep.mubr.bf16.mxu0 0
    %692 = vmatmul.mubr.bf16.gmra.mrb[0].mxu0 %v134
    %v693 = vpop.f32.mrb[0].mxu0
    %v694 = vadd.f32 0.0, %v693
    %v695 = vpop.f32.mrb[0].mxu0
    %v696 = vpop.f32.mrb[0].mxu0
    %v697 = vadd.f32 0.0, %v696
    %v698 = vpop.f32.mrb[0].mxu0
    %699 = vdwg.mxu0
    %s700 = scalar_lea.vmem %s2, 24
    %v701 = vld [vmem:[%s700] sm:$0xf]
    %v702 = vld [vmem:[%s700 + $0x4] sm:$0xf]
    %v703 = vld [vmem:[%s700 + $0x8] sm:$0xf]
    %v704 = vld [vmem:[%s700 + $0xc] sm:$0xf]
    %v705 = vld [vmem:[%s700 + $0x10] sm:$0xf]
    %v706 = vld [vmem:[%s700 + $0x14] sm:$0xf]
    %v713 = vunpack.c.l.b16 %v701
    %v714 = vunpack.c.l.b16 %v702
    %v715 = vunpack.c.l.b16 %v703
    %v716 = vunpack.c.l.b16 %v704
    %v717 = vunpack.c.l.b16 %v705
    %v718 = vunpack.c.l.b16 %v706
    %v719 = vpack.c.b16 %v714, %v713
    %v720 = vpack.c.b16 %v716, %v715
    %v721 = vpack.c.b16 %v718, %v717
    %725 = vmatprep.subr.bf16.mxu0 0
    %726 = vmatpush1.bf16.msra.mxu0 %v719
    %727 = vmatprep.subr.bf16.mxu0 0
    %728 = vmatpush1.bf16.msra.mxu0 %v720
    %729 = vmatprep.subr.bf16.mxu0 0
    %730 = vmatpush1.bf16.msra.mxu0 %v721
    %731 = vmatprep.subr.bf16.mxu0 0
    %732 = vmatpush1.bf16.msra.mxu0 0
    %733 = vmatprep.subr.bf16.mxu0 0
    %734 = vmatpush1.bf16.msra.mxu0 0
    %735 = vmatprep.subr.bf16.mxu0 0
    %736 = vmatpush1.bf16.msra.mxu0 0
    %737 = vmatprep.subr.bf16.mxu0 0
    %738 = vmatpush1.bf16.msra.mxu0 0
    %739 = vmatprep.subr.bf16.mxu0 0
    %740 = vmatpush1.bf16.msra.mxu0 0
    %741 = vmatprep.subr.bf16.mxu0 0
    %742 = vmatpush1.bf16.msra.mxu0 0
    %743 = vmatprep.subr.bf16.mxu0 0
    %744 = vmatpush1.bf16.msra.mxu0 0
    %745 = vmatprep.subr.bf16.mxu0 0
    %746 = vmatpush1.bf16.msra.mxu0 0
    %747 = vmatprep.subr.bf16.mxu0 0
    %748 = vmatpush1.bf16.msra.mxu0 0
    %749 = vmatprep.subr.bf16.mxu0 0
    %750 = vmatpush1.bf16.msra.mxu0 0
    %751 = vmatprep.subr.bf16.mxu0 0
    %752 = vmatpush1.bf16.msra.mxu0 0
    %753 = vmatprep.subr.bf16.mxu0 0
    %754 = vmatpush1.bf16.msra.mxu0 0
    %755 = vmatprep.subr.bf16.mxu0 0
    %756 = vmatpush1.bf16.msra.mxu0 0
    %757 = vmatprep.mubr.bf16.mxu0 0
    %758 = vmatmul.mubr.bf16.gmra.mrb[0].mxu0 %v134
    %v759 = vpop.f32.mrb[0].mxu0
    %v760 = vadd.f32 0.0, %v759
    %v761 = vpop.f32.mrb[0].mxu0
    %v762 = vpop.f32.mrb[0].mxu0
    %v763 = vadd.f32 0.0, %v762
    %v764 = vpop.f32.mrb[0].mxu0
    %765 = vdwg.mxu0
    %s766 = scalar_lea.vmem %s3, 24
    %v767 = vld [vmem:[%s766] sm:$0xf]
    %v768 = vld [vmem:[%s766 + $0x4] sm:$0xf]
    %v769 = vld [vmem:[%s766 + $0x8] sm:$0xf]
    %v770 = vld [vmem:[%s766 + $0xc] sm:$0xf]
    %v771 = vld [vmem:[%s766 + $0x10] sm:$0xf]
    %v772 = vld [vmem:[%s766 + $0x14] sm:$0xf]
    %v779 = vunpack.c.l.b16 %v767
    %v780 = vunpack.c.l.b16 %v768
    %v781 = vunpack.c.l.b16 %v769
    %v782 = vunpack.c.l.b16 %v770
    %v783 = vunpack.c.l.b16 %v771
    %v784 = vunpack.c.l.b16 %v772
    %v785 = vpack.c.b16 %v780, %v779
    %v786 = vpack.c.b16 %v782, %v781
    %v787 = vpack.c.b16 %v784, %v783
    %791 = vmatprep.subr.bf16.mxu0 0
    %792 = vmatpush1.bf16.msra.mxu0 %v785
    %793 = vmatprep.subr.bf16.mxu0 0
    %794 = vmatpush1.bf16.msra.mxu0 %v786
    %795 = vmatprep.subr.bf16.mxu0 0
    %796 = vmatpush1.bf16.msra.mxu0 %v787
    %797 = vmatprep.subr.bf16.mxu0 0
    %798 = vmatpush1.bf16.msra.mxu0 0
    %799 = vmatprep.subr.bf16.mxu0 0
    %800 = vmatpush1.bf16.msra.mxu0 0
    %801 = vmatprep.subr.bf16.mxu0 0
    %802 = vmatpush1.bf16.msra.mxu0 0
    %803 = vmatprep.subr.bf16.mxu0 0
    %804 = vmatpush1.bf16.msra.mxu0 0
    %805 = vmatprep.subr.bf16.mxu0 0
    %806 = vmatpush1.bf16.msra.mxu0 0
    %807 = vmatprep.subr.bf16.mxu0 0
    %808 = vmatpush1.bf16.msra.mxu0 0
    %809 = vmatprep.subr.bf16.mxu0 0
    %810 = vmatpush1.bf16.msra.mxu0 0
    %811 = vmatprep.subr.bf16.mxu0 0
    %812 = vmatpush1.bf16.msra.mxu0 0
    %813 = vmatprep.subr.bf16.mxu0 0
    %814 = vmatpush1.bf16.msra.mxu0 0
    %815 = vmatprep.subr.bf16.mxu0 0
    %816 = vmatpush1.bf16.msra.mxu0 0
    %817 = vmatprep.subr.bf16.mxu0 0
    %818 = vmatpush1.bf16.msra.mxu0 0
    %819 = vmatprep.subr.bf16.mxu0 0
    %820 = vmatpush1.bf16.msra.mxu0 0
    %821 = vmatprep.subr.bf16.mxu0 0
    %822 = vmatpush1.bf16.msra.mxu0 0
    %823 = vmatprep.mubr.bf16.mxu0 0
    %824 = vmatmul.mubr.bf16.gmra.mrb[0].mxu0 %v134
    %v825 = vpop.f32.mrb[0].mxu0
    %v826 = vadd.f32 0.0, %v825
    %v827 = vpop.f32.mrb[0].mxu0
    %v828 = vpop.f32.mrb[0].mxu0
    %v829 = vadd.f32 0.0, %v828
    %v830 = vpop.f32.mrb[0].mxu0
    %831 = vdwg.mxu0
    %v833 = vsel %vm307, %v694, 0
    %v836 = vsel %vm307, %v760, 0
    %838 = vmatprep.subr.mxu0 0.0
    %839 = vmatpush1.xpose.msra.mxu0 %v836
    %840 = vmatprep.subr.mxu0 0.0
    %841 = vmatpush1.xpose.msra.mxu0 0.0
    %842 = vmatprep.subr.mxu0 0.0
    %843 = vmatpush1.xpose.msra.mxu0 0.0
    %844 = vmatprep.subr.mxu0 0.0
    %845 = vmatpush1.xpose.msra.mxu0 0.0
    %846 = vmatprep.subr.mxu0 0.0
    %847 = vmatpush1.xpose.msra.mxu0 0.0
    %848 = vmatprep.subr.mxu0 0.0
    %849 = vmatpush1.xpose.msra.mxu0 0.0
    %850 = vmatprep.subr.mxu0 0.0
    %851 = vmatpush1.xpose.msra.mxu0 0.0
    %852 = vmatprep.subr.mxu0 0.0
    %853 = vmatpush1.xpose.msra.mxu0 0.0
    %854 = vmatprep.subr.mxu0 0.0
    %855 = vmatpush1.xpose.msra.mxu0 0.0
    %856 = vmatprep.subr.mxu0 0.0
    %857 = vmatpush1.xpose.msra.mxu0 0.0
    %858 = vmatprep.subr.mxu0 0.0
    %859 = vmatpush1.xpose.msra.mxu0 0.0
    %860 = vmatprep.subr.mxu0 0.0
    %861 = vmatpush1.xpose.msra.mxu0 0.0
    %862 = vmatprep.subr.mxu0 0.0
    %863 = vmatpush1.xpose.msra.mxu0 0.0
    %864 = vmatprep.subr.mxu0 0.0
    %865 = vmatpush1.xpose.msra.mxu0 0.0
    %866 = vmatprep.subr.mxu0 0.0
    %867 = vmatpush1.xpose.msra.mxu0 0.0
    %868 = vmatprep.subr.mxu0 0.0
    %869 = vmatpush1.xpose.msra.mxu0 0.0
    %870 = vmatprep.subr.mxu0 0.0
    %871 = vmatpush1.xpose.msra.mxu0 0.0
    %872 = vmatprep.subr.mxu0 0.0
    %873 = vmatpush1.xpose.msra.mxu0 0.0
    %874 = vmatprep.subr.mxu0 0.0
    %875 = vmatpush1.xpose.msra.mxu0 0.0
    %876 = vmatprep.subr.mxu0 0.0
    %877 = vmatpush1.xpose.msra.mxu0 0.0
    %878 = vmatprep.subr.mxu0 0.0
    %879 = vmatpush1.xpose.msra.mxu0 0.0
    %880 = vmatprep.subr.mxu0 0.0
    %881 = vmatpush1.xpose.msra.mxu0 0.0
    %882 = vmatprep.subr.mxu0 0.0
    %883 = vmatpush1.xpose.msra.mxu0 0.0
    %884 = vmatprep.subr.mxu0 0.0
    %885 = vmatpush1.xpose.msra.mxu0 0.0
    %886 = vmatprep.subr.mxu0 0.0
    %887 = vmatpush1.xpose.msra.mxu0 0.0
    %888 = vmatprep.subr.mxu0 0.0
    %889 = vmatpush1.xpose.msra.mxu0 0.0
    %890 = vmatprep.subr.mxu0 0.0
    %891 = vmatpush1.xpose.msra.mxu0 0.0
    %892 = vmatprep.subr.mxu0 0.0
    %893 = vmatpush1.xpose.msra.mxu0 0.0
    %894 = vmatprep.subr.mxu0 0.0
    %895 = vmatpush1.xpose.msra.mxu0 0.0
    %896 = vmatprep.subr.mxu0 0.0
    %897 = vmatpush1.xpose.msra.mxu0 0.0
    %898 = vmatprep.subr.mxu0 0.0
    %899 = vmatpush1.xpose.msra.mxu0 0.0
    %900 = vmatprep.subr.mxu0 0.0
    %901 = vmatpush1.xpose.msra.mxu0 0.0
    %902 = vmatprep.mubr.f32.mxu0 0.0
    %903 = vmatmul.mubr.f32.gmra.mrb[0].mxu0 %v833
    %v904 = vpop.f32.mrb[0].mxu0
    %v905 = vadd.f32 0.0, %v904
    %v906 = vpop.f32.mrb[0].mxu0
    %907 = vdwg.mxu0
    %v908 = vmul.f32 %v905, 0.25
    %v909 = vsel %vm385, %v908, -inf
    %910 = vmax.xlane.f32.xlu0 %v909
    %v911 = vpop.xlane.xlu0 %910
    %v912 = vsub.f32 %v908, %v911
    %v913 = vmul.f32 %v912, 1.442695
    %v914 = vpow.pop %v913
    %v915 = vsel %vm385, %v914, 0.0
    %916 = vadd.xlane.f32.xlu0 %v915
    %v917 = vpop.xlane.xlu0 %916
    %v918 = vrcp.pop %v917
    %v919 = vmul.f32 %v914, %v918
    %v921 = vsel %vm385, %v919, 0
    %923 = vmatprep.subr.mxu0 0.0
    %924 = vmatpush1.msra.mxu0 %v826
    %925 = vmatprep.subr.mxu0 0.0
    %926 = vmatpush1.msra.mxu0 0.0
    %927 = vmatprep.subr.mxu0 0.0
    %928 = vmatpush1.msra.mxu0 0.0
    %929 = vmatprep.subr.mxu0 0.0
    %930 = vmatpush1.msra.mxu0 0.0
    %931 = vmatprep.subr.mxu0 0.0
    %932 = vmatpush1.msra.mxu0 0.0
    %933 = vmatprep.subr.mxu0 0.0
    %934 = vmatpush1.msra.mxu0 0.0
    %935 = vmatprep.subr.mxu0 0.0
    %936 = vmatpush1.msra.mxu0 0.0
    %937 = vmatprep.subr.mxu0 0.0
    %938 = vmatpush1.msra.mxu0 0.0
    %939 = vmatprep.subr.mxu0 0.0
    %940 = vmatpush1.msra.mxu0 0.0
    %941 = vmatprep.subr.mxu0 0.0
    %942 = vmatpush1.msra.mxu0 0.0
    %943 = vmatprep.subr.mxu0 0.0
    %944 = vmatpush1.msra.mxu0 0.0
    %945 = vmatprep.subr.mxu0 0.0
    %946 = vmatpush1.msra.mxu0 0.0
    %947 = vmatprep.subr.mxu0 0.0
    %948 = vmatpush1.msra.mxu0 0.0
    %949 = vmatprep.subr.mxu0 0.0
    %950 = vmatpush1.msra.mxu0 0.0
    %951 = vmatprep.subr.mxu0 0.0
    %952 = vmatpush1.msra.mxu0 0.0
    %953 = vmatprep.subr.mxu0 0.0
    %954 = vmatpush1.msra.mxu0 0.0
    %955 = vmatprep.subr.mxu0 0.0
    %956 = vmatpush1.msra.mxu0 0.0
    %957 = vmatprep.subr.mxu0 0.0
    %958 = vmatpush1.msra.mxu0 0.0
    %959 = vmatprep.subr.mxu0 0.0
    %960 = vmatpush1.msra.mxu0 0.0
    %961 = vmatprep.subr.mxu0 0.0
    %962 = vmatpush1.msra.mxu0 0.0
    %963 = vmatprep.subr.mxu0 0.0
    %964 = vmatpush1.msra.mxu0 0.0
    %965 = vmatprep.subr.mxu0 0.0
    %966 = vmatpush1.msra.mxu0 0.0
    %967 = vmatprep.subr.mxu0 0.0
    %968 = vmatpush1.msra.mxu0 0.0
    %969 = vmatprep.subr.mxu0 0.0
    %970 = vmatpush1.msra.mxu0 0.0
    %971 = vmatprep.subr.mxu0 0.0
    %972 = vmatpush1.msra.mxu0 0.0
    %973 = vmatprep.subr.mxu0 0.0
    %974 = vmatpush1.msra.mxu0 0.0
    %975 = vmatprep.subr.mxu0 0.0
    %976 = vmatpush1.msra.mxu0 0.0
    %977 = vmatprep.subr.mxu0 0.0
    %978 = vmatpush1.msra.mxu0 0.0
    %979 = vmatprep.subr.mxu0 0.0
    %980 = vmatpush1.msra.mxu0 0.0
    %981 = vmatprep.subr.mxu0 0.0
    %982 = vmatpush1.msra.mxu0 0.0
    %983 = vmatprep.subr.mxu0 0.0
    %984 = vmatpush1.msra.mxu0 0.0
    %985 = vmatprep.subr.mxu0 0.0
    %986 = vmatpush1.msra.mxu0 0.0
    %987 = vmatprep.mubr.f32.mxu0 0.0
    %988 = vmatmul.mubr.f32.gmra.mrb[0].mxu0 %v921
    %v989 = vpop.f32.mrb[0].mxu0
    %v990 = vadd.f32 0.0, %v989
    %v991 = vpop.f32.mrb[0].mxu0
    %992 = vdwg.mxu0
    %v994 = vsel %vm307, %v697, 0
    %v997 = vsel %vm307, %v763, 0
    %999 = vmatprep.subr.mxu0 0.0
    %1000 = vmatpush1.xpose.msra.mxu0 %v997
    %1001 = vmatprep.subr.mxu0 0.0
    %1002 = vmatpush1.xpose.msra.mxu0 0.0
    %1003 = vmatprep.subr.mxu0 0.0
    %1004 = vmatpush1.xpose.msra.mxu0 0.0
    %1005 = vmatprep.subr.mxu0 0.0
    %1006 = vmatpush1.xpose.msra.mxu0 0.0
    %1007 = vmatprep.subr.mxu0 0.0
    %1008 = vmatpush1.xpose.msra.mxu0 0.0
    %1009 = vmatprep.subr.mxu0 0.0
    %1010 = vmatpush1.xpose.msra.mxu0 0.0
    %1011 = vmatprep.subr.mxu0 0.0
    %1012 = vmatpush1.xpose.msra.mxu0 0.0
    %1013 = vmatprep.subr.mxu0 0.0
    %1014 = vmatpush1.xpose.msra.mxu0 0.0
    %1015 = vmatprep.subr.mxu0 0.0
    %1016 = vmatpush1.xpose.msra.mxu0 0.0
    %1017 = vmatprep.subr.mxu0 0.0
    %1018 = vmatpush1.xpose.msra.mxu0 0.0
    %1019 = vmatprep.subr.mxu0 0.0
    %1020 = vmatpush1.xpose.msra.mxu0 0.0
    %1021 = vmatprep.subr.mxu0 0.0
    %1022 = vmatpush1.xpose.msra.mxu0 0.0
    %1023 = vmatprep.subr.mxu0 0.0
    %1024 = vmatpush1.xpose.msra.mxu0 0.0
    %1025 = vmatprep.subr.mxu0 0.0
    %1026 = vmatpush1.xpose.msra.mxu0 0.0
    %1027 = vmatprep.subr.mxu0 0.0
    %1028 = vmatpush1.xpose.msra.mxu0 0.0
    %1029 = vmatprep.subr.mxu0 0.0
    %1030 = vmatpush1.xpose.msra.mxu0 0.0
    %1031 = vmatprep.subr.mxu0 0.0
    %1032 = vmatpush1.xpose.msra.mxu0 0.0
    %1033 = vmatprep.subr.mxu0 0.0
    %1034 = vmatpush1.xpose.msra.mxu0 0.0
    %1035 = vmatprep.subr.mxu0 0.0
    %1036 = vmatpush1.xpose.msra.mxu0 0.0
    %1037 = vmatprep.subr.mxu0 0.0
    %1038 = vmatpush1.xpose.msra.mxu0 0.0
    %1039 = vmatprep.subr.mxu0 0.0
    %1040 = vmatpush1.xpose.msra.mxu0 0.0
    %1041 = vmatprep.subr.mxu0 0.0
    %1042 = vmatpush1.xpose.msra.mxu0 0.0
    %1043 = vmatprep.subr.mxu0 0.0
    %1044 = vmatpush1.xpose.msra.mxu0 0.0
    %1045 = vmatprep.subr.mxu0 0.0
    %1046 = vmatpush1.xpose.msra.mxu0 0.0
    %1047 = vmatprep.subr.mxu0 0.0
    %1048 = vmatpush1.xpose.msra.mxu0 0.0
    %1049 = vmatprep.subr.mxu0 0.0
    %1050 = vmatpush1.xpose.msra.mxu0 0.0
    %1051 = vmatprep.subr.mxu0 0.0
    %1052 = vmatpush1.xpose.msra.mxu0 0.0
    %1053 = vmatprep.subr.mxu0 0.0
    %1054 = vmatpush1.xpose.msra.mxu0 0.0
    %1055 = vmatprep.subr.mxu0 0.0
    %1056 = vmatpush1.xpose.msra.mxu0 0.0
    %1057 = vmatprep.subr.mxu0 0.0
    %1058 = vmatpush1.xpose.msra.mxu0 0.0
    %1059 = vmatprep.subr.mxu0 0.0
    %1060 = vmatpush1.xpose.msra.mxu0 0.0
    %1061 = vmatprep.subr.mxu0 0.0
    %1062 = vmatpush1.xpose.msra.mxu0 0.0
    %1063 = vmatprep.mubr.f32.mxu0 0.0
    %1064 = vmatmul.mubr.f32.gmra.mrb[0].mxu0 %v994
    %v1065 = vpop.f32.mrb[0].mxu0
    %v1066 = vadd.f32 0.0, %v1065
    %v1067 = vpop.f32.mrb[0].mxu0
    %1068 = vdwg.mxu0
    %v1069 = vmul.f32 %v1066, 0.25
    %v1070 = vsel %vm385, %v1069, -inf
    %1071 = vmax.xlane.f32.xlu0 %v1070
    %v1072 = vpop.xlane.xlu0 %1071
    %v1073 = vsub.f32 %v1069, %v1072
    %v1074 = vmul.f32 %v1073, 1.442695
    %v1075 = vpow.pop %v1074
    %v1076 = vsel %vm385, %v1075, 0.0
    %1077 = vadd.xlane.f32.xlu0 %v1076
    %v1078 = vpop.xlane.xlu0 %1077
    %v1079 = vrcp.pop %v1078
    %v1080 = vmul.f32 %v1075, %v1079
    %v1082 = vsel %vm385, %v1080, 0
    %1084 = vmatprep.subr.mxu0 0.0
    %1085 = vmatpush1.msra.mxu0 %v829
    %1086 = vmatprep.subr.mxu0 0.0
    %1087 = vmatpush1.msra.mxu0 0.0
    %1088 = vmatprep.subr.mxu0 0.0
    %1089 = vmatpush1.msra.mxu0 0.0
    %1090 = vmatprep.subr.mxu0 0.0
    %1091 = vmatpush1.msra.mxu0 0.0
    %1092 = vmatprep.subr.mxu0 0.0
    %1093 = vmatpush1.msra.mxu0 0.0
    %1094 = vmatprep.subr.mxu0 0.0
    %1095 = vmatpush1.msra.mxu0 0.0
    %1096 = vmatprep.subr.mxu0 0.0
    %1097 = vmatpush1.msra.mxu0 0.0
    %1098 = vmatprep.subr.mxu0 0.0
    %1099 = vmatpush1.msra.mxu0 0.0
    %1100 = vmatprep.subr.mxu0 0.0
    %1101 = vmatpush1.msra.mxu0 0.0
    %1102 = vmatprep.subr.mxu0 0.0
    %1103 = vmatpush1.msra.mxu0 0.0
    %1104 = vmatprep.subr.mxu0 0.0
    %1105 = vmatpush1.msra.mxu0 0.0
    %1106 = vmatprep.subr.mxu0 0.0
    %1107 = vmatpush1.msra.mxu0 0.0
    %1108 = vmatprep.subr.mxu0 0.0
    %1109 = vmatpush1.msra.mxu0 0.0
    %1110 = vmatprep.subr.mxu0 0.0
    %1111 = vmatpush1.msra.mxu0 0.0
    %1112 = vmatprep.subr.mxu0 0.0
    %1113 = vmatpush1.msra.mxu0 0.0
    %1114 = vmatprep.subr.mxu0 0.0
    %1115 = vmatpush1.msra.mxu0 0.0
    %1116 = vmatprep.subr.mxu0 0.0
    %1117 = vmatpush1.msra.mxu0 0.0
    %1118 = vmatprep.subr.mxu0 0.0
    %1119 = vmatpush1.msra.mxu0 0.0
    %1120 = vmatprep.subr.mxu0 0.0
    %1121 = vmatpush1.msra.mxu0 0.0
    %1122 = vmatprep.subr.mxu0 0.0
    %1123 = vmatpush1.msra.mxu0 0.0
    %1124 = vmatprep.subr.mxu0 0.0
    %1125 = vmatpush1.msra.mxu0 0.0
    %1126 = vmatprep.subr.mxu0 0.0
    %1127 = vmatpush1.msra.mxu0 0.0
    %1128 = vmatprep.subr.mxu0 0.0
    %1129 = vmatpush1.msra.mxu0 0.0
    %1130 = vmatprep.subr.mxu0 0.0
    %1131 = vmatpush1.msra.mxu0 0.0
    %1132 = vmatprep.subr.mxu0 0.0
    %1133 = vmatpush1.msra.mxu0 0.0
    %1134 = vmatprep.subr.mxu0 0.0
    %1135 = vmatpush1.msra.mxu0 0.0
    %1136 = vmatprep.subr.mxu0 0.0
    %1137 = vmatpush1.msra.mxu0 0.0
    %1138 = vmatprep.subr.mxu0 0.0
    %1139 = vmatpush1.msra.mxu0 0.0
    %1140 = vmatprep.subr.mxu0 0.0
    %1141 = vmatpush1.msra.mxu0 0.0
    %1142 = vmatprep.subr.mxu0 0.0
    %1143 = vmatpush1.msra.mxu0 0.0
    %1144 = vmatprep.subr.mxu0 0.0
    %1145 = vmatpush1.msra.mxu0 0.0
    %1146 = vmatprep.subr.mxu0 0.0
    %1147 = vmatpush1.msra.mxu0 0.0
    %1148 = vmatprep.mubr.f32.mxu0 0.0
    %1149 = vmatmul.mubr.f32.gmra.mrb[0].mxu0 %v1082
    %v1150 = vpop.f32.mrb[0].mxu0
    %v1151 = vadd.f32 0.0, %v1150
    %v1152 = vpop.f32.mrb[0].mxu0
    %1153 = vdwg.mxu0
    %v1154 = vpack.c.bf16 %v1151, %v990
    %s1155 = scalar_lea.vmem %s4, 8
    %v1156 = vld [vmem:[%s1155] sm:$0xf]
    %v1157 = vld [vmem:[%s1155 + $0x4] sm:$0xf]
    %v1160 = vunpack.c.l.b16 %v1156
    %v1161 = vunpack.c.l.b16 %v1157
    %v1162 = vpack.c.b16 %v1161, %v1160
    %v1165 = vsel %vm307, %v1154, 0
    %1167 = vmatprep.subr.bf16.mxu0 0
    %1168 = vmatpush1.bf16.msra.mxu0 %v1162
    %1169 = vmatprep.subr.bf16.mxu0 0
    %1170 = vmatpush1.bf16.msra.mxu0 0
    %1171 = vmatprep.subr.bf16.mxu0 0
    %1172 = vmatpush1.bf16.msra.mxu0 0
    %1173 = vmatprep.subr.bf16.mxu0 0
    %1174 = vmatpush1.bf16.msra.mxu0 0
    %1175 = vmatprep.subr.bf16.mxu0 0
    %1176 = vmatpush1.bf16.msra.mxu0 0
    %1177 = vmatprep.subr.bf16.mxu0 0
    %1178 = vmatpush1.bf16.msra.mxu0 0
    %1179 = vmatprep.subr.bf16.mxu0 0
    %1180 = vmatpush1.bf16.msra.mxu0 0
    %1181 = vmatprep.subr.bf16.mxu0 0
    %1182 = vmatpush1.bf16.msra.mxu0 0
    %1183 = vmatprep.subr.bf16.mxu0 0
    %1184 = vmatpush1.bf16.msra.mxu0 0
    %1185 = vmatprep.subr.bf16.mxu0 0
    %1186 = vmatpush1.bf16.msra.mxu0 0
    %1187 = vmatprep.subr.bf16.mxu0 0
    %1188 = vmatpush1.bf16.msra.mxu0 0
    %1189 = vmatprep.subr.bf16.mxu0 0
    %1190 = vmatpush1.bf16.msra.mxu0 0
    %1191 = vmatprep.subr.bf16.mxu0 0
    %1192 = vmatpush1.bf16.msra.mxu0 0
    %1193 = vmatprep.subr.bf16.mxu0 0
    %1194 = vmatpush1.bf16.msra.mxu0 0
    %1195 = vmatprep.subr.bf16.mxu0 0
    %1196 = vmatpush1.bf16.msra.mxu0 0
    %1197 = vmatprep.subr.bf16.mxu0 0
    %1198 = vmatpush1.bf16.msra.mxu0 0
    %1199 = vmatprep.mubr.bf16.mxu0 0
    %1200 = vmatmul.mubr.bf16.gmra.mrb[0].mxu0 %v1165
    %v1201 = vpop.f32.mrb[0].mxu0
    %v1202 = vadd.f32 0.0, %v1201
    %v1203 = vpop.f32.mrb[0].mxu0
    %v1204 = vpop.f32.mrb[0].mxu0
    %v1205 = vadd.f32 0.0, %v1204
    %v1206 = vpop.f32.mrb[0].mxu0
    %1207 = vdwg.mxu0
    %v1210 = vunpack.c.l.b16 %v632
    %v1211 = vunpack.c.l.b16 %v633
    %v1212 = vpack.c.b16 %v1211, %v1210
    %v1215 = vsel %vm307, %v631, 0
    %1217 = vmatprep.subr.bf16.mxu0 0
    %1218 = vmatpush1.bf16.msra.mxu0 %v1212
    %1219 = vmatprep.subr.bf16.mxu0 0
    %1220 = vmatpush1.bf16.msra.mxu0 0
    %1221 = vmatprep.subr.bf16.mxu0 0
    %1222 = vmatpush1.bf16.msra.mxu0 0
    %1223 = vmatprep.subr.bf16.mxu0 0
    %1224 = vmatpush1.bf16.msra.mxu0 0
    %1225 = vmatprep.subr.bf16.mxu0 0
    %1226 = vmatpush1.bf16.msra.mxu0 0
    %1227 = vmatprep.subr.bf16.mxu0 0
    %1228 = vmatpush1.bf16.msra.mxu0 0
    %1229 = vmatprep.subr.bf16.mxu0 0
    %1230 = vmatpush1.bf16.msra.mxu0 0
    %1231 = vmatprep.subr.bf16.mxu0 0
    %1232 = vmatpush1.bf16.msra.mxu0 0
    %1233 = vmatprep.subr.bf16.mxu0 0
    %1234 = vmatpush1.bf16.msra.mxu0 0
    %1235 = vmatprep.subr.bf16.mxu0 0
    %1236 = vmatpush1.bf16.msra.mxu0 0
    %1237 = vmatprep.subr.bf16.mxu0 0
    %1238 = vmatpush1.bf16.msra.mxu0 0
    %1239 = vmatprep.subr.bf16.mxu0 0
    %1240 = vmatpush1.bf16.msra.mxu0 0
    %1241 = vmatprep.subr.bf16.mxu0 0
    %1242 = vmatpush1.bf16.msra.mxu0 0
    %1243 = vmatprep.subr.bf16.mxu0 0
    %1244 = vmatpush1.bf16.msra.mxu0 0
    %1245 = vmatprep.subr.bf16.mxu0 0
    %1246 = vmatpush1.bf16.msra.mxu0 0
    %1247 = vmatprep.subr.bf16.mxu0 0
    %1248 = vmatpush1.bf16.msra.mxu0 0
    %1249 = vmatprep.mubr.bf16.mxu0 0
    %1250 = vmatmul.mubr.bf16.gmra.mrb[0].mxu0 %v1215
    %v1251 = vpop.f32.mrb[0].mxu0
    %v1252 = vadd.f32 %v1202, %v1251
    %v1253 = vpop.f32.mrb[0].mxu0
    %v1254 = vpop.f32.mrb[0].mxu0
    %v1255 = vadd.f32 %v1205, %v1254
    %v1256 = vpop.f32.mrb[0].mxu0
    %1257 = vdwg.mxu0
    %s1258 = scalar_lea.vmem %s1, 48
    %v1259 = vld [vmem:[%s1258] sm:$0xf]
    %v1260 = vld [vmem:[%s1258 + $0x4] sm:$0xf]
    %v1261 = vld [vmem:[%s1258 + $0x8] sm:$0xf]
    %v1262 = vld [vmem:[%s1258 + $0xc] sm:$0xf]
    %v1263 = vld [vmem:[%s1258 + $0x10] sm:$0xf]
    %v1264 = vld [vmem:[%s1258 + $0x14] sm:$0xf]
    %v1271 = vunpack.c.l.b16 %v1259
    %v1272 = vunpack.c.l.b16 %v1260
    %v1273 = vunpack.c.l.b16 %v1261
    %v1274 = vunpack.c.l.b16 %v1262
    %v1275 = vunpack.c.l.b16 %v1263
    %v1276 = vunpack.c.l.b16 %v1264
    %v1277 = vpack.c.b16 %v1272, %v1271
    %v1278 = vpack.c.b16 %v1274, %v1273
    %v1279 = vpack.c.b16 %v1276, %v1275
    %1283 = vmatprep.subr.bf16.mxu0 0
    %1284 = vmatpush1.bf16.msra.mxu0 %v1277
    %1285 = vmatprep.subr.bf16.mxu0 0
    %1286 = vmatpush1.bf16.msra.mxu0 %v1278
    %1287 = vmatprep.subr.bf16.mxu0 0
    %1288 = vmatpush1.bf16.msra.mxu0 %v1279
    %1289 = vmatprep.subr.bf16.mxu0 0
    %1290 = vmatpush1.bf16.msra.mxu0 0
    %1291 = vmatprep.subr.bf16.mxu0 0
    %1292 = vmatpush1.bf16.msra.mxu0 0
    %1293 = vmatprep.subr.bf16.mxu0 0
    %1294 = vmatpush1.bf16.msra.mxu0 0
    %1295 = vmatprep.subr.bf16.mxu0 0
    %1296 = vmatpush1.bf16.msra.mxu0 0
    %1297 = vmatprep.subr.bf16.mxu0 0
    %1298 = vmatpush1.bf16.msra.mxu0 0
    %1299 = vmatprep.subr.bf16.mxu0 0
    %1300 = vmatpush1.bf16.msra.mxu0 0
    %1301 = vmatprep.subr.bf16.mxu0 0
    %1302 = vmatpush1.bf16.msra.mxu0 0
    %1303 = vmatprep.subr.bf16.mxu0 0
    %1304 = vmatpush1.bf16.msra.mxu0 0
    %1305 = vmatprep.subr.bf16.mxu0 0
    %1306 = vmatpush1.bf16.msra.mxu0 0
    %1307 = vmatprep.subr.bf16.mxu0 0
    %1308 = vmatpush1.bf16.msra.mxu0 0
    %1309 = vmatprep.subr.bf16.mxu0 0
    %1310 = vmatpush1.bf16.msra.mxu0 0
    %1311 = vmatprep.subr.bf16.mxu0 0
    %1312 = vmatpush1.bf16.msra.mxu0 0
    %1313 = vmatprep.subr.bf16.mxu0 0
    %1314 = vmatpush1.bf16.msra.mxu0 0
    %1315 = vmatprep.mubr.bf16.mxu0 0
    %1316 = vmatmul.mubr.bf16.gmra.mrb[0].mxu0 %v134
    %v1317 = vpop.f32.mrb[0].mxu0
    %v1318 = vadd.f32 0.0, %v1317
    %v1319 = vpop.f32.mrb[0].mxu0
    %v1320 = vpop.f32.mrb[0].mxu0
    %v1321 = vadd.f32 0.0, %v1320
    %v1322 = vpop.f32.mrb[0].mxu0
    %1323 = vdwg.mxu0
    %s1324 = scalar_lea.vmem %s2, 48
    %v1325 = vld [vmem:[%s1324] sm:$0xf]
    %v1326 = vld [vmem:[%s1324 + $0x4] sm:$0xf]
    %v1327 = vld [vmem:[%s1324 + $0x8] sm:$0xf]
    %v1328 = vld [vmem:[%s1324 + $0xc] sm:$0xf]
    %v1329 = vld [vmem:[%s1324 + $0x10] sm:$0xf]
    %v1330 = vld [vmem:[%s1324 + $0x14] sm:$0xf]
    %v1337 = vunpack.c.l.b16 %v1325
    %v1338 = vunpack.c.l.b16 %v1326
    %v1339 = vunpack.c.l.b16 %v1327
    %v1340 = vunpack.c.l.b16 %v1328
    %v1341 = vunpack.c.l.b16 %v1329
    %v1342 = vunpack.c.l.b16 %v1330
    %v1343 = vpack.c.b16 %v1338, %v1337
    %v1344 = vpack.c.b16 %v1340, %v1339
    %v1345 = vpack.c.b16 %v1342, %v1341
    %1349 = vmatprep.subr.bf16.mxu0 0
    %1350 = vmatpush1.bf16.msra.mxu0 %v1343
    %1351 = vmatprep.subr.bf16.mxu0 0
    %1352 = vmatpush1.bf16.msra.mxu0 %v1344
    %1353 = vmatprep.subr.bf16.mxu0 0
    %1354 = vmatpush1.bf16.msra.mxu0 %v1345
    %1355 = vmatprep.subr.bf16.mxu0 0
    %1356 = vmatpush1.bf16.msra.mxu0 0
    %1357 = vmatprep.subr.bf16.mxu0 0
    %1358 = vmatpush1.bf16.msra.mxu0 0
    %1359 = vmatprep.subr.bf16.mxu0 0
    %1360 = vmatpush1.bf16.msra.mxu0 0
    %1361 = vmatprep.subr.bf16.mxu0 0
    %1362 = vmatpush1.bf16.msra.mxu0 0
    %1363 = vmatprep.subr.bf16.mxu0 0
    %1364 = vmatpush1.bf16.msra.mxu0 0
    %1365 = vmatprep.subr.bf16.mxu0 0
    %1366 = vmatpush1.bf16.msra.mxu0 0
    %1367 = vmatprep.subr.bf16.mxu0 0
    %1368 = vmatpush1.bf16.msra.mxu0 0
    %1369 = vmatprep.subr.bf16.mxu0 0
    %1370 = vmatpush1.bf16.msra.mxu0 0
    %1371 = vmatprep.subr.bf16.mxu0 0
    %1372 = vmatpush1.bf16.msra.mxu0 0
    %1373 = vmatprep.subr.bf16.mxu0 0
    %1374 = vmatpush1.bf16.msra.mxu0 0
    %1375 = vmatprep.subr.bf16.mxu0 0
    %1376 = vmatpush1.bf16.msra.mxu0 0
    %1377 = vmatprep.subr.bf16.mxu0 0
    %1378 = vmatpush1.bf16.msra.mxu0 0
    %1379 = vmatprep.subr.bf16.mxu0 0
    %1380 = vmatpush1.bf16.msra.mxu0 0
    %1381 = vmatprep.mubr.bf16.mxu0 0
    %1382 = vmatmul.mubr.bf16.gmra.mrb[0].mxu0 %v134
    %v1383 = vpop.f32.mrb[0].mxu0
    %v1384 = vadd.f32 0.0, %v1383
    %v1385 = vpop.f32.mrb[0].mxu0
    %v1386 = vpop.f32.mrb[0].mxu0
    %v1387 = vadd.f32 0.0, %v1386
    %v1388 = vpop.f32.mrb[0].mxu0
    %1389 = vdwg.mxu0
    %s1390 = scalar_lea.vmem %s3, 48
    %v1391 = vld [vmem:[%s1390] sm:$0xf]
    %v1392 = vld [vmem:[%s1390 + $0x4] sm:$0xf]
    %v1393 = vld [vmem:[%s1390 + $0x8] sm:$0xf]
    %v1394 = vld [vmem:[%s1390 + $0xc] sm:$0xf]
    %v1395 = vld [vmem:[%s1390 + $0x10] sm:$0xf]
    %v1396 = vld [vmem:[%s1390 + $0x14] sm:$0xf]
    %v1403 = vunpack.c.l.b16 %v1391
    %v1404 = vunpack.c.l.b16 %v1392
    %v1405 = vunpack.c.l.b16 %v1393
    %v1406 = vunpack.c.l.b16 %v1394
    %v1407 = vunpack.c.l.b16 %v1395
    %v1408 = vunpack.c.l.b16 %v1396
    %v1409 = vpack.c.b16 %v1404, %v1403
    %v1410 = vpack.c.b16 %v1406, %v1405
    %v1411 = vpack.c.b16 %v1408, %v1407
    %1415 = vmatprep.subr.bf16.mxu0 0
    %1416 = vmatpush1.bf16.msra.mxu0 %v1409
    %1417 = vmatprep.subr.bf16.mxu0 0
    %1418 = vmatpush1.bf16.msra.mxu0 %v1410
    %1419 = vmatprep.subr.bf16.mxu0 0
    %1420 = vmatpush1.bf16.msra.mxu0 %v1411
    %1421 = vmatprep.subr.bf16.mxu0 0
    %1422 = vmatpush1.bf16.msra.mxu0 0
    %1423 = vmatprep.subr.bf16.mxu0 0
    %1424 = vmatpush1.bf16.msra.mxu0 0
    %1425 = vmatprep.subr.bf16.mxu0 0
    %1426 = vmatpush1.bf16.msra.mxu0 0
    %1427 = vmatprep.subr.bf16.mxu0 0
    %1428 = vmatpush1.bf16.msra.mxu0 0
    %1429 = vmatprep.subr.bf16.mxu0 0
    %1430 = vmatpush1.bf16.msra.mxu0 0
    %1431 = vmatprep.subr.bf16.mxu0 0
    %1432 = vmatpush1.bf16.msra.mxu0 0
    %1433 = vmatprep.subr.bf16.mxu0 0
    %1434 = vmatpush1.bf16.msra.mxu0 0
    %1435 = vmatprep.subr.bf16.mxu0 0
    %1436 = vmatpush1.bf16.msra.mxu0 0
    %1437 = vmatprep.subr.bf16.mxu0 0
    %1438 = vmatpush1.bf16.msra.mxu0 0
    %1439 = vmatprep.subr.bf16.mxu0 0
    %1440 = vmatpush1.bf16.msra.mxu0 0
    %1441 = vmatprep.subr.bf16.mxu0 0
    %1442 = vmatpush1.bf16.msra.mxu0 0
    %1443 = vmatprep.subr.bf16.mxu0 0
    %1444 = vmatpush1.bf16.msra.mxu0 0
    %1445 = vmatprep.subr.bf16.mxu0 0
    %1446 = vmatpush1.bf16.msra.mxu0 0
    %1447 = vmatprep.mubr.bf16.mxu0 0
    %1448 = vmatmul.mubr.bf16.gmra.mrb[0].mxu0 %v134
    %v1449 = vpop.f32.mrb[0].mxu0
    %v1450 = vadd.f32 0.0, %v1449
    %v1451 = vpop.f32.mrb[0].mxu0
    %v1452 = vpop.f32.mrb[0].mxu0
    %v1453 = vadd.f32 0.0, %v1452
    %v1454 = vpop.f32.mrb[0].mxu0
    %1455 = vdwg.mxu0
    %v1457 = vsel %vm307, %v1318, 0
    %v1460 = vsel %vm307, %v1384, 0
    %1462 = vmatprep.subr.mxu0 0.0
    %1463 = vmatpush1.xpose.msra.mxu0 %v1460
    %1464 = vmatprep.subr.mxu0 0.0
    %1465 = vmatpush1.xpose.msra.mxu0 0.0
    %1466 = vmatprep.subr.mxu0 0.0
    %1467 = vmatpush1.xpose.msra.mxu0 0.0
    %1468 = vmatprep.subr.mxu0 0.0
    %1469 = vmatpush1.xpose.msra.mxu0 0.0
    %1470 = vmatprep.subr.mxu0 0.0
    %1471 = vmatpush1.xpose.msra.mxu0 0.0
    %1472 = vmatprep.subr.mxu0 0.0
    %1473 = vmatpush1.xpose.msra.mxu0 0.0
    %1474 = vmatprep.subr.mxu0 0.0
    %1475 = vmatpush1.xpose.msra.mxu0 0.0
    %1476 = vmatprep.subr.mxu0 0.0
    %1477 = vmatpush1.xpose.msra.mxu0 0.0
    %1478 = vmatprep.subr.mxu0 0.0
    %1479 = vmatpush1.xpose.msra.mxu0 0.0
    %1480 = vmatprep.subr.mxu0 0.0
    %1481 = vmatpush1.xpose.msra.mxu0 0.0
    %1482 = vmatprep.subr.mxu0 0.0
    %1483 = vmatpush1.xpose.msra.mxu0 0.0
    %1484 = vmatprep.subr.mxu0 0.0
    %1485 = vmatpush1.xpose.msra.mxu0 0.0
    %1486 = vmatprep.subr.mxu0 0.0
    %1487 = vmatpush1.xpose.msra.mxu0 0.0
    %1488 = vmatprep.subr.mxu0 0.0
    %1489 = vmatpush1.xpose.msra.mxu0 0.0
    %1490 = vmatprep.subr.mxu0 0.0
    %1491 = vmatpush1.xpose.msra.mxu0 0.0
    %1492 = vmatprep.subr.mxu0 0.0
    %1493 = vmatpush1.xpose.msra.mxu0 0.0
    %1494 = vmatprep.subr.mxu0 0.0
    %1495 = vmatpush1.xpose.msra.mxu0 0.0
    %1496 = vmatprep.subr.mxu0 0.0
    %1497 = vmatpush1.xpose.msra.mxu0 0.0
    %1498 = vmatprep.subr.mxu0 0.0
    %1499 = vmatpush1.xpose.msra.mxu0 0.0
    %1500 = vmatprep.subr.mxu0 0.0
    %1501 = vmatpush1.xpose.msra.mxu0 0.0
    %1502 = vmatprep.subr.mxu0 0.0
    %1503 = vmatpush1.xpose.msra.mxu0 0.0
    %1504 = vmatprep.subr.mxu0 0.0
    %1505 = vmatpush1.xpose.msra.mxu0 0.0
    %1506 = vmatprep.subr.mxu0 0.0
    %1507 = vmatpush1.xpose.msra.mxu0 0.0
    %1508 = vmatprep.subr.mxu0 0.0
    %1509 = vmatpush1.xpose.msra.mxu0 0.0
    %1510 = vmatprep.subr.mxu0 0.0
    %1511 = vmatpush1.xpose.msra.mxu0 0.0
    %1512 = vmatprep.subr.mxu0 0.0
    %1513 = vmatpush1.xpose.msra.mxu0 0.0
    %1514 = vmatprep.subr.mxu0 0.0
    %1515 = vmatpush1.xpose.msra.mxu0 0.0
    %1516 = vmatprep.subr.mxu0 0.0
    %1517 = vmatpush1.xpose.msra.mxu0 0.0
    %1518 = vmatprep.subr.mxu0 0.0
    %1519 = vmatpush1.xpose.msra.mxu0 0.0
    %1520 = vmatprep.subr.mxu0 0.0
    %1521 = vmatpush1.xpose.msra.mxu0 0.0
    %1522 = vmatprep.subr.mxu0 0.0
    %1523 = vmatpush1.xpose.msra.mxu0 0.0
    %1524 = vmatprep.subr.mxu0 0.0
    %1525 = vmatpush1.xpose.msra.mxu0 0.0
    %1526 = vmatprep.mubr.f32.mxu0 0.0
    %1527 = vmatmul.mubr.f32.gmra.mrb[0].mxu0 %v1457
    %v1528 = vpop.f32.mrb[0].mxu0
    %v1529 = vadd.f32 0.0, %v1528
    %v1530 = vpop.f32.mrb[0].mxu0
    %1531 = vdwg.mxu0
    %v1532 = vmul.f32 %v1529, 0.25
    %v1533 = vsel %vm385, %v1532, -inf
    %1534 = vmax.xlane.f32.xlu0 %v1533
    %v1535 = vpop.xlane.xlu0 %1534
    %v1536 = vsub.f32 %v1532, %v1535
    %v1537 = vmul.f32 %v1536, 1.442695
    %v1538 = vpow.pop %v1537
    %v1539 = vsel %vm385, %v1538, 0.0
    %1540 = vadd.xlane.f32.xlu0 %v1539
    %v1541 = vpop.xlane.xlu0 %1540
    %v1542 = vrcp.pop %v1541
    %v1543 = vmul.f32 %v1538, %v1542
    %v1545 = vsel %vm385, %v1543, 0
    %1547 = vmatprep.subr.mxu0 0.0
    %1548 = vmatpush1.msra.mxu0 %v1450
    %1549 = vmatprep.subr.mxu0 0.0
    %1550 = vmatpush1.msra.mxu0 0.0
    %1551 = vmatprep.subr.mxu0 0.0
    %1552 = vmatpush1.msra.mxu0 0.0
    %1553 = vmatprep.subr.mxu0 0.0
    %1554 = vmatpush1.msra.mxu0 0.0
    %1555 = vmatprep.subr.mxu0 0.0
    %1556 = vmatpush1.msra.mxu0 0.0
    %1557 = vmatprep.subr.mxu0 0.0
    %1558 = vmatpush1.msra.mxu0 0.0
    %1559 = vmatprep.subr.mxu0 0.0
    %1560 = vmatpush1.msra.mxu0 0.0
    %1561 = vmatprep.subr.mxu0 0.0
    %1562 = vmatpush1.msra.mxu0 0.0
    %1563 = vmatprep.subr.mxu0 0.0
    %1564 = vmatpush1.msra.mxu0 0.0
    %1565 = vmatprep.subr.mxu0 0.0
    %1566 = vmatpush1.msra.mxu0 0.0
    %1567 = vmatprep.subr.mxu0 0.0
    %1568 = vmatpush1.msra.mxu0 0.0
    %1569 = vmatprep.subr.mxu0 0.0
    %1570 = vmatpush1.msra.mxu0 0.0
    %1571 = vmatprep.subr.mxu0 0.0
    %1572 = vmatpush1.msra.mxu0 0.0
    %1573 = vmatprep.subr.mxu0 0.0
    %1574 = vmatpush1.msra.mxu0 0.0
    %1575 = vmatprep.subr.mxu0 0.0
    %1576 = vmatpush1.msra.mxu0 0.0
    %1577 = vmatprep.subr.mxu0 0.0
    %1578 = vmatpush1.msra.mxu0 0.0
    %1579 = vmatprep.subr.mxu0 0.0
    %1580 = vmatpush1.msra.mxu0 0.0
    %1581 = vmatprep.subr.mxu0 0.0
    %1582 = vmatpush1.msra.mxu0 0.0
    %1583 = vmatprep.subr.mxu0 0.0
    %1584 = vmatpush1.msra.mxu0 0.0
    %1585 = vmatprep.subr.mxu0 0.0
    %1586 = vmatpush1.msra.mxu0 0.0
    %1587 = vmatprep.subr.mxu0 0.0
    %1588 = vmatpush1.msra.mxu0 0.0
    %1589 = vmatprep.subr.mxu0 0.0
    %1590 = vmatpush1.msra.mxu0 0.0
    %1591 = vmatprep.subr.mxu0 0.0
    %1592 = vmatpush1.msra.mxu0 0.0
    %1593 = vmatprep.subr.mxu0 0.0
    %1594 = vmatpush1.msra.mxu0 0.0
    %1595 = vmatprep.subr.mxu0 0.0
    %1596 = vmatpush1.msra.mxu0 0.0
    %1597 = vmatprep.subr.mxu0 0.0
    %1598 = vmatpush1.msra.mxu0 0.0
    %1599 = vmatprep.subr.mxu0 0.0
    %1600 = vmatpush1.msra.mxu0 0.0
    %1601 = vmatprep.subr.mxu0 0.0
    %1602 = vmatpush1.msra.mxu0 0.0
    %1603 = vmatprep.subr.mxu0 0.0
    %1604 = vmatpush1.msra.mxu0 0.0
    %1605 = vmatprep.subr.mxu0 0.0
    %1606 = vmatpush1.msra.mxu0 0.0
    %1607 = vmatprep.subr.mxu0 0.0
    %1608 = vmatpush1.msra.mxu0 0.0
    %1609 = vmatprep.subr.mxu0 0.0
    %1610 = vmatpush1.msra.mxu0 0.0
    %1611 = vmatprep.mubr.f32.mxu0 0.0
    %1612 = vmatmul.mubr.f32.gmra.mrb[0].mxu0 %v1545
    %v1613 = vpop.f32.mrb[0].mxu0
    %v1614 = vadd.f32 0.0, %v1613
    %v1615 = vpop.f32.mrb[0].mxu0
    %1616 = vdwg.mxu0
    %v1618 = vsel %vm307, %v1321, 0
    %v1621 = vsel %vm307, %v1387, 0
    %1623 = vmatprep.subr.mxu0 0.0
    %1624 = vmatpush1.xpose.msra.mxu0 %v1621
    %1625 = vmatprep.subr.mxu0 0.0
    %1626 = vmatpush1.xpose.msra.mxu0 0.0
    %1627 = vmatprep.subr.mxu0 0.0
    %1628 = vmatpush1.xpose.msra.mxu0 0.0
    %1629 = vmatprep.subr.mxu0 0.0
    %1630 = vmatpush1.xpose.msra.mxu0 0.0
    %1631 = vmatprep.subr.mxu0 0.0
    %1632 = vmatpush1.xpose.msra.mxu0 0.0
    %1633 = vmatprep.subr.mxu0 0.0
    %1634 = vmatpush1.xpose.msra.mxu0 0.0
    %1635 = vmatprep.subr.mxu0 0.0
    %1636 = vmatpush1.xpose.msra.mxu0 0.0
    %1637 = vmatprep.subr.mxu0 0.0
    %1638 = vmatpush1.xpose.msra.mxu0 0.0
    %1639 = vmatprep.subr.mxu0 0.0
    %1640 = vmatpush1.xpose.msra.mxu0 0.0
    %1641 = vmatprep.subr.mxu0 0.0
    %1642 = vmatpush1.xpose.msra.mxu0 0.0
    %1643 = vmatprep.subr.mxu0 0.0
    %1644 = vmatpush1.xpose.msra.mxu0 0.0
    %1645 = vmatprep.subr.mxu0 0.0
    %1646 = vmatpush1.xpose.msra.mxu0 0.0
    %1647 = vmatprep.subr.mxu0 0.0
    %1648 = vmatpush1.xpose.msra.mxu0 0.0
    %1649 = vmatprep.subr.mxu0 0.0
    %1650 = vmatpush1.xpose.msra.mxu0 0.0
    %1651 = vmatprep.subr.mxu0 0.0
    %1652 = vmatpush1.xpose.msra.mxu0 0.0
    %1653 = vmatprep.subr.mxu0 0.0
    %1654 = vmatpush1.xpose.msra.mxu0 0.0
    %1655 = vmatprep.subr.mxu0 0.0
    %1656 = vmatpush1.xpose.msra.mxu0 0.0
    %1657 = vmatprep.subr.mxu0 0.0
    %1658 = vmatpush1.xpose.msra.mxu0 0.0
    %1659 = vmatprep.subr.mxu0 0.0
    %1660 = vmatpush1.xpose.msra.mxu0 0.0
    %1661 = vmatprep.subr.mxu0 0.0
    %1662 = vmatpush1.xpose.msra.mxu0 0.0
    %1663 = vmatprep.subr.mxu0 0.0
    %1664 = vmatpush1.xpose.msra.mxu0 0.0
    %1665 = vmatprep.subr.mxu0 0.0
    %1666 = vmatpush1.xpose.msra.mxu0 0.0
    %1667 = vmatprep.subr.mxu0 0.0
    %1668 = vmatpush1.xpose.msra.mxu0 0.0
    %1669 = vmatprep.subr.mxu0 0.0
    %1670 = vmatpush1.xpose.msra.mxu0 0.0
    %1671 = vmatprep.subr.mxu0 0.0
    %1672 = vmatpush1.xpose.msra.mxu0 0.0
    %1673 = vmatprep.subr.mxu0 0.0
    %1674 = vmatpush1.xpose.msra.mxu0 0.0
    %1675 = vmatprep.subr.mxu0 0.0
    %1676 = vmatpush1.xpose.msra.mxu0 0.0
    %1677 = vmatprep.subr.mxu0 0.0
    %1678 = vmatpush1.xpose.msra.mxu0 0.0
    %1679 = vmatprep.subr.mxu0 0.0
    %1680 = vmatpush1.xpose.msra.mxu0 0.0
    %1681 = vmatprep.subr.mxu0 0.0
    %1682 = vmatpush1.xpose.msra.mxu0 0.0
    %1683 = vmatprep.subr.mxu0 0.0
    %1684 = vmatpush1.xpose.msra.mxu0 0.0
    %1685 = vmatprep.subr.mxu0 0.0
    %1686 = vmatpush1.xpose.msra.mxu0 0.0
    %1687 = vmatprep.mubr.f32.mxu0 0.0
    %1688 = vmatmul.mubr.f32.gmra.mrb[0].mxu0 %v1618
    %v1689 = vpop.f32.mrb[0].mxu0
    %v1690 = vadd.f32 0.0, %v1689
    %v1691 = vpop.f32.mrb[0].mxu0
    %1692 = vdwg.mxu0
    %v1693 = vmul.f32 %v1690, 0.25
    %v1694 = vsel %vm385, %v1693, -inf
    %1695 = vmax.xlane.f32.xlu0 %v1694
    %v1696 = vpop.xlane.xlu0 %1695
    %v1697 = vsub.f32 %v1693, %v1696
    %v1698 = vmul.f32 %v1697, 1.442695
    %v1699 = vpow.pop %v1698
    %v1700 = vsel %vm385, %v1699, 0.0
    %1701 = vadd.xlane.f32.xlu0 %v1700
    %v1702 = vpop.xlane.xlu0 %1701
    %v1703 = vrcp.pop %v1702
    %v1704 = vmul.f32 %v1699, %v1703
    %v1706 = vsel %vm385, %v1704, 0
    %1708 = vmatprep.subr.mxu0 0.0
    %1709 = vmatpush1.msra.mxu0 %v1453
    %1710 = vmatprep.subr.mxu0 0.0
    %1711 = vmatpush1.msra.mxu0 0.0
    %1712 = vmatprep.subr.mxu0 0.0
    %1713 = vmatpush1.msra.mxu0 0.0
    %1714 = vmatprep.subr.mxu0 0.0
    %1715 = vmatpush1.msra.mxu0 0.0
    %1716 = vmatprep.subr.mxu0 0.0
    %1717 = vmatpush1.msra.mxu0 0.0
    %1718 = vmatprep.subr.mxu0 0.0
    %1719 = vmatpush1.msra.mxu0 0.0
    %1720 = vmatprep.subr.mxu0 0.0
    %1721 = vmatpush1.msra.mxu0 0.0
    %1722 = vmatprep.subr.mxu0 0.0
    %1723 = vmatpush1.msra.mxu0 0.0
    %1724 = vmatprep.subr.mxu0 0.0
    %1725 = vmatpush1.msra.mxu0 0.0
    %1726 = vmatprep.subr.mxu0 0.0
    %1727 = vmatpush1.msra.mxu0 0.0
    %1728 = vmatprep.subr.mxu0 0.0
    %1729 = vmatpush1.msra.mxu0 0.0
    %1730 = vmatprep.subr.mxu0 0.0
    %1731 = vmatpush1.msra.mxu0 0.0
    %1732 = vmatprep.subr.mxu0 0.0
    %1733 = vmatpush1.msra.mxu0 0.0
    %1734 = vmatprep.subr.mxu0 0.0
    %1735 = vmatpush1.msra.mxu0 0.0
    %1736 = vmatprep.subr.mxu0 0.0
    %1737 = vmatpush1.msra.mxu0 0.0
    %1738 = vmatprep.subr.mxu0 0.0
    %1739 = vmatpush1.msra.mxu0 0.0
    %1740 = vmatprep.subr.mxu0 0.0
    %1741 = vmatpush1.msra.mxu0 0.0
    %1742 = vmatprep.subr.mxu0 0.0
    %1743 = vmatpush1.msra.mxu0 0.0
    %1744 = vmatprep.subr.mxu0 0.0
    %1745 = vmatpush1.msra.mxu0 0.0
    %1746 = vmatprep.subr.mxu0 0.0
    %1747 = vmatpush1.msra.mxu0 0.0
    %1748 = vmatprep.subr.mxu0 0.0
    %1749 = vmatpush1.msra.mxu0 0.0
    %1750 = vmatprep.subr.mxu0 0.0
    %1751 = vmatpush1.msra.mxu0 0.0
    %1752 = vmatprep.subr.mxu0 0.0
    %1753 = vmatpush1.msra.mxu0 0.0
    %1754 = vmatprep.subr.mxu0 0.0
    %1755 = vmatpush1.msra.mxu0 0.0
    %1756 = vmatprep.subr.mxu0 0.0
    %1757 = vmatpush1.msra.mxu0 0.0
    %1758 = vmatprep.subr.mxu0 0.0
    %1759 = vmatpush1.msra.mxu0 0.0
    %1760 = vmatprep.subr.mxu0 0.0
    %1761 = vmatpush1.msra.mxu0 0.0
    %1762 = vmatprep.subr.mxu0 0.0
    %1763 = vmatpush1.msra.mxu0 0.0
    %1764 = vmatprep.subr.mxu0 0.0
    %1765 = vmatpush1.msra.mxu0 0.0
    %1766 = vmatprep.subr.mxu0 0.0
    %1767 = vmatpush1.msra.mxu0 0.0
    %1768 = vmatprep.subr.mxu0 0.0
    %1769 = vmatpush1.msra.mxu0 0.0
    %1770 = vmatprep.subr.mxu0 0.0
    %1771 = vmatpush1.msra.mxu0 0.0
    %1772 = vmatprep.mubr.f32.mxu0 0.0
    %1773 = vmatmul.mubr.f32.gmra.mrb[0].mxu0 %v1706
    %v1774 = vpop.f32.mrb[0].mxu0
    %v1775 = vadd.f32 0.0, %v1774
    %v1776 = vpop.f32.mrb[0].mxu0
    %1777 = vdwg.mxu0
    %v1778 = vpack.c.bf16 %v1775, %v1614
    %s1779 = scalar_lea.vmem %s4, 16
    %v1780 = vld [vmem:[%s1779] sm:$0xf]
    %v1781 = vld [vmem:[%s1779 + $0x4] sm:$0xf]
    %v1784 = vunpack.c.l.b16 %v1780
    %v1785 = vunpack.c.l.b16 %v1781
    %v1786 = vpack.c.b16 %v1785, %v1784
    %v1789 = vsel %vm307, %v1778, 0
    %1791 = vmatprep.subr.bf16.mxu0 0
    %1792 = vmatpush1.bf16.msra.mxu0 %v1786
    %1793 = vmatprep.subr.bf16.mxu0 0
    %1794 = vmatpush1.bf16.msra.mxu0 0
    %1795 = vmatprep.subr.bf16.mxu0 0
    %1796 = vmatpush1.bf16.msra.mxu0 0
    %1797 = vmatprep.subr.bf16.mxu0 0
    %1798 = vmatpush1.bf16.msra.mxu0 0
    %1799 = vmatprep.subr.bf16.mxu0 0
    %1800 = vmatpush1.bf16.msra.mxu0 0
    %1801 = vmatprep.subr.bf16.mxu0 0
    %1802 = vmatpush1.bf16.msra.mxu0 0
    %1803 = vmatprep.subr.bf16.mxu0 0
    %1804 = vmatpush1.bf16.msra.mxu0 0
    %1805 = vmatprep.subr.bf16.mxu0 0
    %1806 = vmatpush1.bf16.msra.mxu0 0
    %1807 = vmatprep.subr.bf16.mxu0 0
    %1808 = vmatpush1.bf16.msra.mxu0 0
    %1809 = vmatprep.subr.bf16.mxu0 0
    %1810 = vmatpush1.bf16.msra.mxu0 0
    %1811 = vmatprep.subr.bf16.mxu0 0
    %1812 = vmatpush1.bf16.msra.mxu0 0
    %1813 = vmatprep.subr.bf16.mxu0 0
    %1814 = vmatpush1.bf16.msra.mxu0 0
    %1815 = vmatprep.subr.bf16.mxu0 0
    %1816 = vmatpush1.bf16.msra.mxu0 0
    %1817 = vmatprep.subr.bf16.mxu0 0
    %1818 = vmatpush1.bf16.msra.mxu0 0
    %1819 = vmatprep.subr.bf16.mxu0 0
    %1820 = vmatpush1.bf16.msra.mxu0 0
    %1821 = vmatprep.subr.bf16.mxu0 0
    %1822 = vmatpush1.bf16.msra.mxu0 0
    %1823 = vmatprep.mubr.bf16.mxu0 0
    %1824 = vmatmul.mubr.bf16.gmra.mrb[0].mxu0 %v1789
    %v1825 = vpop.f32.mrb[0].mxu0
    %v1826 = vadd.f32 0.0, %v1825
    %v1827 = vpop.f32.mrb[0].mxu0
    %v1828 = vpop.f32.mrb[0].mxu0
    %v1829 = vadd.f32 0.0, %v1828
    %v1830 = vpop.f32.mrb[0].mxu0
    %1831 = vdwg.mxu0
    %v1832 = vadd.f32 %v1252, %v1826
    %v1833 = vadd.f32 %v1255, %v1829
    %v1834 = vadd.f32 %v46, %v1832
    %v1835 = vadd.f32 %v47, %v1833
    %v1836 = vld [vmem:[%s11] sm:$0x1]
    %v1837 = vld [vmem:[%s12] sm:$0x1]
    %v1838 = vsel %vm50, %v1834, 0.0
    %1839 = vadd.xlane.f32.xlu0 %v1838
    %v1840 = vpop.xlane.xlu0 %1839
    %v1841 = vsel %vm50, %v1835, 0.0
    %1842 = vadd.xlane.f32.xlu0 %v1841
    %v1843 = vpop.xlane.xlu0 %1842
    %v1844 = vmul.f32 %v1840, %v57
    %v1845 = vmul.f32 %v1843, %v57
    %v1846 = vsub.f32 %v1834, %v1844
    %v1847 = vsub.f32 %v1835, %v1845
    %v1848 = vmul.f32 %v1846, %v1846
    %v1849 = vmul.f32 %v1847, %v1847
    %v1850 = vsel %vm50, %v1848, 0.0
    %1851 = vadd.xlane.f32.xlu0 %v1850
    %v1852 = vpop.xlane.xlu0 %1851
    %v1853 = vsel %vm50, %v1849, 0.0
    %1854 = vadd.xlane.f32.xlu0 %v1853
    %v1855 = vpop.xlane.xlu0 %1854
    %v1856 = vmul.f32 %v1852, 0.021276595
    %v1857 = vmul.f32 %v1855, 0.021276595
    %v1858 = vrsqrt.pop %v1856
    %v1859 = vmul.f32 %v1856, %v1858
    %vm1860 = vcmp.eq.f32.partialorder %v1856, inf
    %v1861 = vsel %vm1860, %v1856, %v1859
    %vm1862 = vcmp.eq.f32.partialorder %v1856, 0.0
    %v1863 = vand.u32 %v1856, 2147483648
    %v1864 = vsel %vm1862, %v1863, %v1861
    %v1865 = vrsqrt.pop %v1857
    %v1866 = vmul.f32 %v1857, %v1865
    %vm1867 = vcmp.eq.f32.partialorder %v1857, inf
    %v1868 = vsel %vm1867, %v1857, %v1866
    %vm1869 = vcmp.eq.f32.partialorder %v1857, 0.0
    %v1870 = vand.u32 %v1857, 2147483648
    %v1871 = vsel %vm1869, %v1870, %v1868
    %v1872 = vadd.f32 %v1864, 1e-06
    %v1873 = vadd.f32 %v1871, 1e-06
    %v1874 = vrcp.pop %v1872
    %v1875 = vrcp.pop %v1873
    %v1876 = vmul.f32 %v1846, %v1874
    %v1877 = vmul.f32 %v1847, %v1875
    %v1879 = vlaneseq
    %v1880 = vshrl.u32 %v1879, 7
    %v1881 = vsub.s32 0, %v1880
    %v1882 = vrot.slane %v1836, %v1881
    %v1884 = vmul.f32 %v1882, %v1876
    %v1885 = vmul.f32 %v1882, %v1877
    %v1887 = vlaneseq
    %v1888 = vshrl.u32 %v1887, 7
    %v1889 = vsub.s32 0, %v1888
    %v1890 = vrot.slane %v1837, %v1889
    %v1892 = vadd.f32 %v1884, %v1890
    %v1893 = vadd.f32 %v1885, %v1890
    %v1894 = vpack.c.bf16 %v1893, %v1892
    %v1895 = vld [vmem:[%s7] sm:$0xf]
    %v1896 = vld [vmem:[%s7 + $0x4] sm:$0xf]
    %v1897 = vld [vmem:[%s7 + $0x8] sm:$0xf]
    %v1898 = vld [vmem:[%s7 + $0xc] sm:$0xf]
    %v1899 = vld [vmem:[%s7 + $0x10] sm:$0xf]
    %v1900 = vld [vmem:[%s7 + $0x14] sm:$0xf]
    %v1901 = vld [vmem:[%s8] sm:$0x1]
    %v1903 = vlaneseq
    %v1904 = vshrl.u32 %v1903, 7
    %v1905 = vsub.s32 0, %v1904
    %v1906 = vrot.slane %v1901, %v1905
    %v1914 = vunpack.c.l.b16 %v1895
    %v1915 = vunpack.c.l.b16 %v1896
    %v1916 = vunpack.c.l.b16 %v1897
    %v1917 = vunpack.c.l.b16 %v1898
    %v1918 = vunpack.c.l.b16 %v1899
    %v1919 = vunpack.c.l.b16 %v1900
    %v1920 = vpack.c.b16 %v1915, %v1914
    %v1921 = vpack.c.b16 %v1917, %v1916
    %v1922 = vpack.c.b16 %v1919, %v1918
    %v1927 = vsel %vm50, %v1894, 0
    %1929 = vmatprep.subr.bf16.mxu0 0
    %1930 = vmatpush1.bf16.msra.mxu0 %v1920
    %1931 = vmatprep.subr.bf16.mxu0 0
    %1932 = vmatpush1.bf16.msra.mxu0 %v1921
    %1933 = vmatprep.subr.bf16.mxu0 0
    %1934 = vmatpush1.bf16.msra.mxu0 %v1922
    %1935 = vmatprep.subr.bf16.mxu0 0
    %1936 = vmatpush1.bf16.msra.mxu0 0
    %1937 = vmatprep.subr.bf16.mxu0 0
    %1938 = vmatpush1.bf16.msra.mxu0 0
    %1939 = vmatprep.subr.bf16.mxu0 0
    %1940 = vmatpush1.bf16.msra.mxu0 0
    %1941 = vmatprep.subr.bf16.mxu0 0
    %1942 = vmatpush1.bf16.msra.mxu0 0
    %1943 = vmatprep.subr.bf16.mxu0 0
    %1944 = vmatpush1.bf16.msra.mxu0 0
    %1945 = vmatprep.subr.bf16.mxu0 0
    %1946 = vmatpush1.bf16.msra.mxu0 0
    %1947 = vmatprep.subr.bf16.mxu0 0
    %1948 = vmatpush1.bf16.msra.mxu0 0
    %1949 = vmatprep.subr.bf16.mxu0 0
    %1950 = vmatpush1.bf16.msra.mxu0 0
    %1951 = vmatprep.subr.bf16.mxu0 0
    %1952 = vmatpush1.bf16.msra.mxu0 0
    %1953 = vmatprep.subr.bf16.mxu0 0
    %1954 = vmatpush1.bf16.msra.mxu0 0
    %1955 = vmatprep.subr.bf16.mxu0 0
    %1956 = vmatpush1.bf16.msra.mxu0 0
    %1957 = vmatprep.subr.bf16.mxu0 0
    %1958 = vmatpush1.bf16.msra.mxu0 0
    %1959 = vmatprep.subr.bf16.mxu0 0
    %1960 = vmatpush1.bf16.msra.mxu0 0
    %1961 = vmatprep.mubr.bf16.mxu0 0
    %1962 = vmatmul.mubr.bf16.gmra.mrb[0].mxu0 %v1927
    %v1963 = vpop.f32.mrb[0].mxu0
    %v1964 = vadd.f32 %v1906, %v1963
    %v1965 = vpop.f32.mrb[0].mxu0
    %v1966 = vpop.f32.mrb[0].mxu0
    %v1967 = vadd.f32 %v1906, %v1966
    %v1968 = vpop.f32.mrb[0].mxu0
    %1969 = vdwg.mxu0
    %v1970 = vmax.f32 %v1964, 0.0
    %v1971 = vmax.f32 %v1967, 0.0
    %v1972 = vpack.c.bf16 %v1971, %v1970
    %v1973 = vld [vmem:[%s9] sm:$0xf]
    %v1974 = vld [vmem:[%s9 + $0x4] sm:$0xf]
    %v1975 = vld [vmem:[%s9 + $0x8] sm:$0xf]
    %v1976 = vld [vmem:[%s9 + $0xc] sm:$0xf]
    %v1977 = vld [vmem:[%s9 + $0x10] sm:$0xf]
    %v1978 = vld [vmem:[%s9 + $0x14] sm:$0xf]
    %v1979 = vld [vmem:[%s9 + $0x18] sm:$0xf]
    %v1980 = vld [vmem:[%s9 + $0x1c] sm:$0xf]
    %v1981 = vld [vmem:[%s9 + $0x20] sm:$0xf]
    %v1982 = vld [vmem:[%s9 + $0x24] sm:$0xf]
    %v1983 = vld [vmem:[%s9 + $0x28] sm:$0xf]
    %v1984 = vld [vmem:[%s9 + $0x2c] sm:$0xf]
    %v1985 = vld [vmem:[%s10] sm:$0x1]
    %v1987 = vlaneseq
    %v1988 = vshrl.u32 %v1987, 7
    %v1989 = vsub.s32 0, %v1988
    %v1990 = vrot.slane %v1985, %v1989
    %v2004 = vunpack.c.l.b16 %v1973
    %v2005 = vunpack.c.l.b16 %v1974
    %v2006 = vunpack.c.l.b16 %v1975
    %v2007 = vunpack.c.l.b16 %v1976
    %v2008 = vunpack.c.l.b16 %v1977
    %v2009 = vunpack.c.l.b16 %v1978
    %v2010 = vunpack.c.l.b16 %v1979
    %v2011 = vunpack.c.l.b16 %v1980
    %v2012 = vunpack.c.l.b16 %v1981
    %v2013 = vunpack.c.l.b16 %v1982
    %v2014 = vunpack.c.l.b16 %v1983
    %v2015 = vunpack.c.l.b16 %v1984
    %v2016 = vpack.c.b16 %v2005, %v2004
    %v2017 = vpack.c.b16 %v2007, %v2006
    %v2018 = vpack.c.b16 %v2009, %v2008
    %v2019 = vpack.c.b16 %v2011, %v2010
    %v2020 = vpack.c.b16 %v2013, %v2012
    %v2021 = vpack.c.b16 %v2015, %v2014
    %vm2028 = vcmask 785408
    %v2030 = vsel %vm2028, %v1972, 0
    %2032 = vmatprep.subr.bf16.mxu0 0
    %2033 = vmatpush1.bf16.msra.mxu0 %v2016
    %2034 = vmatprep.subr.bf16.mxu0 0
    %2035 = vmatpush1.bf16.msra.mxu0 %v2017
    %2036 = vmatprep.subr.bf16.mxu0 0
    %2037 = vmatpush1.bf16.msra.mxu0 %v2018
    %2038 = vmatprep.subr.bf16.mxu0 0
    %2039 = vmatpush1.bf16.msra.mxu0 %v2019
    %2040 = vmatprep.subr.bf16.mxu0 0
    %2041 = vmatpush1.bf16.msra.mxu0 %v2020
    %2042 = vmatprep.subr.bf16.mxu0 0
    %2043 = vmatpush1.bf16.msra.mxu0 %v2021
    %2044 = vmatprep.subr.bf16.mxu0 0
    %2045 = vmatpush1.bf16.msra.mxu0 0
    %2046 = vmatprep.subr.bf16.mxu0 0
    %2047 = vmatpush1.bf16.msra.mxu0 0
    %2048 = vmatprep.subr.bf16.mxu0 0
    %2049 = vmatpush1.bf16.msra.mxu0 0
    %2050 = vmatprep.subr.bf16.mxu0 0
    %2051 = vmatpush1.bf16.msra.mxu0 0
    %2052 = vmatprep.subr.bf16.mxu0 0
    %2053 = vmatpush1.bf16.msra.mxu0 0
    %2054 = vmatprep.subr.bf16.mxu0 0
    %2055 = vmatpush1.bf16.msra.mxu0 0
    %2056 = vmatprep.subr.bf16.mxu0 0
    %2057 = vmatpush1.bf16.msra.mxu0 0
    %2058 = vmatprep.subr.bf16.mxu0 0
    %2059 = vmatpush1.bf16.msra.mxu0 0
    %2060 = vmatprep.subr.bf16.mxu0 0
    %2061 = vmatpush1.bf16.msra.mxu0 0
    %2062 = vmatprep.subr.bf16.mxu0 0
    %2063 = vmatpush1.bf16.msra.mxu0 0
    %2064 = vmatprep.mubr.bf16.mxu0 0
    %2065 = vmatmul.mubr.bf16.gmra.mrb[0].mxu0 %v2030
    %v2066 = vpop.f32.mrb[0].mxu0
    %v2067 = vadd.f32 %v1990, %v2066
    %v2068 = vpop.f32.mrb[0].mxu0
    %v2069 = vpop.f32.mrb[0].mxu0
    %v2070 = vadd.f32 %v1990, %v2069
    %v2071 = vpop.f32.mrb[0].mxu0
    %2072 = vdwg.mxu0
    %v2073 = vadd.f32 %v1834, %v2067
    %v2074 = vadd.f32 %v1835, %v2070
    %2075 = vst.msk [vmem:[#allocation2] sm:$0xff] %vm50, %v2073
    %2076 = vst.msk [vmem:[#allocation2 + $0x8] sm:$0xff] %vm50, %v2074
    // Predicated region
    $region54: #{tpu_custom_call.1} parent=1 // pred_check
      _
    $region55: #{tpu_custom_call.1} parent=1 // pred_check_branch
      %2078 = sbr.rel (0) target = $region57
    $region56: #{tpu_custom_call.1} parent=1 // pred_region
      %s2080 = ssub.s32 256, 256
      %2081 = vsyncadd [#allocation3], %s2080
      %s2082 = sshll.u32 [#allocation2], 4
      %s2083 = int_to_ptr.vmem [resolvable:$true] %s2082
      %2088 = dma.vmem_to_hbm [thread:$0]  %s2083, 256, %s13, [#allocation3], 128, 128, 8
    $region57: #{tpu_custom_call.1} parent=1 // pred_fallthru
      _
    // Predicated region
    $region58: #{tpu_custom_call.1} parent=1 // pred_check
      _
    $region59: #{tpu_custom_call.1} parent=1 // pred_check_branch
      %2090 = sbr.rel (0) target = $region61
    $region60: #{tpu_custom_call.1} parent=1 // pred_region
      %2091 = dma.done [#allocation3], 256
    $region61: #{tpu_custom_call.1} parent=1 // pred_fallthru
      _
    %2092 = vsyncpa [#allocation3], 1

</llo_original>
